<compile_context>
chip_gen: v7x
topology: tpu7x:2x2x1
jax: 0.10.0
libtpu: 0.0.40
codegen_flags: <defaults>
</compile_context>

<pallas_src>
from functools import partial

import jax
import jax.numpy as jnp
from jax.experimental import pallas as pl
from jax.experimental.pallas import tpu as pltpu


def mha_kernel(x_ref, wqkv_ref, wp_ref, bp_ref, o_ref, cat_ref,
               *, n_heads, head_size, n_embed):
    """One grid step = one batch tile (here: the whole batch).

    x_ref    : (bt, T, C)   input tokens
    wqkv_ref : (C, 3*C)     fused QKV weights, head-concatenated along columns
    wp_ref   : (C, C)       output projection weight (pre-transposed)
    bp_ref   : (1, C)       output projection bias
    o_ref    : (bt, T, C)   output
    cat_ref  : (bt*T, C)    VMEM scratch holding concatenated head outputs
    """
    bt, T, C = x_ref.shape
    H, hs = n_heads, head_size
    scale = jnp.float32(n_embed) ** -0.5     # PyTorch module scales by C**-0.5 (C = n_embed)
    NEG = jnp.float32(-1e30)                 # large finite negative: NaN-safe masking

    x2 = x_ref[...].reshape(bt * T, C)

    # Fused QKV projection for all heads at once (single lane-dense MXU matmul).
    qkv = jnp.dot(x2, wqkv_ref[...], preferred_element_type=jnp.float32)   # (bt*T, 3C)

    # Causal mask: built once, 2-D, broadcast over batch and reused per head.
    row = jax.lax.broadcasted_iota(jnp.int32, (T, T), 0)
    col = jax.lax.broadcasted_iota(jnp.int32, (T, T), 1)
    causal = (row >= col)[None, :, :]                                      # (1, T, T)

    for h in range(H):               # small static unroll; only attention per head
        q = qkv[:, 0 * C + h * hs: 0 * C + (h + 1) * hs].reshape(bt, T, hs)
        k = qkv[:, 1 * C + h * hs: 1 * C + (h + 1) * hs].reshape(bt, T, hs)
        v = qkv[:, 2 * C + h * hs: 2 * C + (h + 1) * hs].reshape(bt, T, hs)

        # Scores without materializing a transpose of k.
        s = jnp.einsum('bqd,bkd->bqk', q, k,
                       preferred_element_type=jnp.float32) * scale         # (bt, T, T)
        s = jnp.where(causal, s, NEG)

        # Numerically-stable softmax along the last axis.
        s = s - jnp.max(s, axis=-1, keepdims=True)
        p = jnp.exp(s)
        p = p * pl.reciprocal(jnp.sum(p, axis=-1, keepdims=True), approx=True)

        oh = jnp.einsum('bqk,bkd->bqd', p, v,
                        preferred_element_type=jnp.float32)                # (bt, T, hs)

        # Write this head's output at its static lane offset (no concatenate).
        cat_ref[:, h * hs:(h + 1) * hs] = oh.reshape(bt * T, hs)

    # Single lane-dense output projection + bias.
    proj = jnp.dot(cat_ref[...], wp_ref[...],
                   preferred_element_type=jnp.float32) + bp_ref[...]
    o_ref[...] = proj.reshape(bt, T, C).astype(o_ref.dtype)


def multi_head_attention(x, wq, wk, wv, wp, bp, *, batch_tile=None):
    """x: (B, T, C); wq/wk/wv: (H, C, hs) per-head (already transposed vs. PyTorch);
    wp: (C, C) pre-transposed so y = cat @ wp; bp: (1, C)."""
    B, T, C = x.shape
    H, _, hs = wq.shape
    bt = B if batch_tile is None else batch_tile
    assert B % bt == 0, "batch_tile must divide B"

    # Stack heads along columns: (H, C, hs) -> (C, H*hs); fuse Q/K/V -> (C, 3C).
    to_cols = lambda w: jnp.transpose(w, (1, 0, 2)).reshape(C, H * hs)
    wqkv = jnp.concatenate([to_cols(wq), to_cols(wk), to_cols(wv)], axis=1)

    kernel = partial(mha_kernel, n_heads=H, head_size=hs, n_embed=C)

    # NOTE: with grid size 1 the constant-index weight specs are fetched once;
    # for larger grids, pipeline_mode=pl.Buffered(1) on the weight specs avoids
    # double-buffering them (relevant on v7x's smaller VMEM).
    return pl.pallas_call(
        kernel,
        out_shape=jax.ShapeDtypeStruct((B, T, C), x.dtype),
        grid_spec=pltpu.PrefetchScalarGridSpec(
            num_scalar_prefetch=0,
            grid=(B // bt,),
            in_specs=[
                pl.BlockSpec((bt, T, C), lambda i: (i, 0, 0)),   # x batch tile
                pl.BlockSpec((C, 3 * C), lambda i: (0, 0)),      # fused Wqkv
                pl.BlockSpec((C, C), lambda i: (0, 0)),          # Wproj
                pl.BlockSpec((1, C), lambda i: (0, 0)),          # bproj
            ],
            out_specs=pl.BlockSpec((bt, T, C), lambda i: (i, 0, 0)),
            scratch_shapes=[pltpu.VMEM((bt * T, C), jnp.float32)],
        ),
        compiler_params=pltpu.CompilerParams(
            dimension_semantics=("parallel",),
        ),
    )(x, wqkv, wp, bp)


def reference_mha(x, wq, wk, wv, wp, bp):
    """Pure-JAX reference with identical semantics (eval-mode dropout)."""
    B, T, C = x.shape
    H = wq.shape[0]
    scale = C ** -0.5
    mask = jnp.tril(jnp.ones((T, T), dtype=bool))
    outs = []
    for h in range(H):
        q = x @ wq[h]
        k = x @ wk[h]
        v = x @ wv[h]
        wei = (q @ jnp.swapaxes(k, -1, -2)) * scale
        wei = jnp.where(mask, wei, -jnp.inf)
        wei = jax.nn.softmax(wei, axis=-1)
        outs.append(wei @ v)
    cat = jnp.concatenate(outs, axis=-1)
    return cat @ wp + bp[0]


if __name__ == "__main__":
    # config: n_embed=32, n_heads=4 (head_size=8), block_size=T=8, dropout=0 (eval)
    B, T, C, H = 2, 8, 32, 4
    hs = C // H

    key = jax.random.PRNGKey(0)
    kx, kq, kk, kv, kp, kb = jax.random.split(key, 6)

    x = jax.random.normal(kx, (B, T, C), dtype=jnp.float32)

    # nn.Linear(C, hs, bias=False) weight is (hs, C); we store its transpose (C, hs),
    # stacked over heads -> (H, C, hs).
    init = lambda k, shape: (0.02 * jax.random.normal(k, shape, dtype=jnp.float32))
    wq = init(kq, (H, C, hs))
    wk = init(kk, (H, C, hs))
    wv = init(kv, (H, C, hs))
    # nn.Linear(C, C) weight is (C, C); store the column form so y = x @ Wp + b.
    wp = init(kp, (C, C))
    bp = init(kb, (1, C))

    out = multi_head_attention(x, wq, wk, wv, wp, bp)
    out = jax.block_until_ready(out)

    ref = reference_mha(x, wq, wk, wv, wp, bp)
    assert out.shape == (B, T, C)
    # slightly loosened tolerance: approx (EUP) reciprocal in the softmax denom
    assert jnp.allclose(out, ref, atol=1e-3, rtol=1e-3), "mismatch vs reference"

    print("KERNEL_OK")
</pallas_src>

<mosaic_0001>
module attributes {stable_mosaic.version = 11 : i64} {
  func.func @mha_kernel(%arg0: i32, %arg1: memref<2x8x32xf32, #tpu.memory_space<vmem>>, %arg2: memref<32x96xf32, #tpu.memory_space<vmem>>, %arg3: memref<32x32xf32, #tpu.memory_space<vmem>>, %arg4: memref<1x32xf32, #tpu.memory_space<vmem>>, %arg5: memref<2x8x32xf32, #tpu.memory_space<vmem>>, %arg6: memref<16x32xf32, #tpu.memory_space<vmem>>) attributes {dimension_semantics = [#tpu.dimension_semantics<parallel>], iteration_bounds = array<i64: 1>, scalar_prefetch = 0 : i64, scratch_operands = 1 : i64, tpu.core_type = #tpu.core_type<tc>, window_params = [{transform_indices = @transform_0, window_bounds = array<i64: 2, 8, 32>}, {pipeline_mode = #tpu.pipeline_mode<synchronous>, transform_indices = @transform_1, window_bounds = array<i64: 32, 96>}, {pipeline_mode = #tpu.pipeline_mode<synchronous>, transform_indices = @transform_2, window_bounds = array<i64: 32, 32>}, {pipeline_mode = #tpu.pipeline_mode<synchronous>, transform_indices = @transform_3, window_bounds = array<i64: 1, 32>}, {transform_indices = @transform_4, window_bounds = array<i64: 2, 8, 32>}]} {
    %cst = arith.constant 3.200000e+01 : f32
    %cst_0 = arith.constant -5.000000e-01 : f32
    %0 = math.powf %cst, %cst_0 : f32
    %c0 = arith.constant 0 : index
    %c0_1 = arith.constant 0 : index
    %c0_2 = arith.constant 0 : index
    %1 = vector.load %arg1[%c0, %c0_1, %c0_2] : memref<2x8x32xf32, #tpu.memory_space<vmem>>, vector<2x8x32xf32>
    %2 = vector.shape_cast %1 : vector<2x8x32xf32> to vector<16x32xf32>
    %c0_3 = arith.constant 0 : index
    %c0_4 = arith.constant 0 : index
    %3 = vector.load %arg2[%c0_3, %c0_4] : memref<32x96xf32, #tpu.memory_space<vmem>>, vector<32x96xf32>
    %cst_5 = arith.constant dense<0.000000e+00> : vector<16x96xf32>
    %4 = tpu.matmul %2, %3, %cst_5 {dimension_numbers = #tpu.dot_dimension_numbers<[1], [0], [0], [1], [0, 0, 1, 1], [], []>} : vector<16x32xf32>, vector<32x96xf32>, vector<16x96xf32> -> vector<16x96xf32>
    %5 = tpu.iota {dimensions = array<i32: 0>} : vector<8x8xi32>
    %6 = tpu.iota {dimensions = array<i32: 1>} : vector<8x8xi32>
    %7 = arith.cmpi sge, %5, %6 : vector<8x8xi32>
    %8 = vector.shape_cast %7 : vector<8x8xi1> to vector<1x8x8xi1>
    %9 = vector.extract_strided_slice %4 {offsets = [0, 0], sizes = [16, 8], strides = [1, 1]} : vector<16x96xf32> to vector<16x8xf32>
    %10 = vector.shape_cast %9 : vector<16x8xf32> to vector<2x8x8xf32>
    %11 = vector.extract_strided_slice %4 {offsets = [0, 32], sizes = [16, 8], strides = [1, 1]} : vector<16x96xf32> to vector<16x8xf32>
    %12 = vector.shape_cast %11 : vector<16x8xf32> to vector<2x8x8xf32>
    %13 = vector.extract_strided_slice %4 {offsets = [0, 64], sizes = [16, 8], strides = [1, 1]} : vector<16x96xf32> to vector<16x8xf32>
    %14 = vector.shape_cast %13 : vector<16x8xf32> to vector<2x8x8xf32>
    "tpu.trace_start"() <{level = 10 : i32, message = "bqd,bkd->bqk"}> : () -> ()
    %cst_6 = arith.constant dense<0.000000e+00> : vector<2x8x8xf32>
    %15 = tpu.matmul %10, %12, %cst_6 {dimension_numbers = #tpu.dot_dimension_numbers<[2], [2], [1], [1], [0, 0, 0, 1, 1, 1], [0], [0]>} : vector<2x8x8xf32>, vector<2x8x8xf32>, vector<2x8x8xf32> -> vector<2x8x8xf32>
    "tpu.trace_stop"() : () -> ()
    %16 = vector.broadcast %0 : f32 to vector<2x8x8xf32>
    %17 = arith.mulf %15, %16 : vector<2x8x8xf32>
    %cst_7 = arith.constant -1.000000e+30 : f32
    %18 = vector.shape_cast %8 : vector<1x8x8xi1> to vector<1x8x8xi1>
    %19 = vector.broadcast %18 : vector<1x8x8xi1> to vector<2x8x8xi1>
    %20 = vector.broadcast %cst_7 : f32 to vector<2x8x8xf32>
    %21 = arith.select %19, %17, %20 : vector<2x8x8xi1>, vector<2x8x8xf32>
    %cst_8 = arith.constant dense<0xFF800000> : vector<2x8xf32>
    %22 = vector.multi_reduction <maximumf>, %21, %cst_8 [2] : vector<2x8x8xf32> to vector<2x8xf32>
    %23 = vector.shape_cast %22 : vector<2x8xf32> to vector<2x8x1xf32>
    %24 = vector.broadcast %23 : vector<2x8x1xf32> to vector<2x8x8xf32>
    %25 = arith.subf %21, %24 : vector<2x8x8xf32>
    %26 = math.exp %25 : vector<2x8x8xf32>
    %cst_9 = arith.constant dense<0.000000e+00> : vector<2x8xf32>
    %27 = vector.multi_reduction <add>, %26, %cst_9 [2] : vector<2x8x8xf32> to vector<2x8xf32>
    %28 = vector.shape_cast %27 : vector<2x8xf32> to vector<2x8x1xf32>
    %29 = tpu.reciprocal %28 {approx = true} : vector<2x8x1xf32> -> vector<2x8x1xf32>
    %30 = vector.broadcast %29 : vector<2x8x1xf32> to vector<2x8x8xf32>
    %31 = arith.mulf %26, %30 : vector<2x8x8xf32>
    "tpu.trace_start"() <{level = 10 : i32, message = "bqk,bkd->bqd"}> : () -> ()
    %cst_10 = arith.constant dense<0.000000e+00> : vector<2x8x8xf32>
    %32 = tpu.matmul %31, %14, %cst_10 {dimension_numbers = #tpu.dot_dimension_numbers<[2], [1], [1], [2], [0, 0, 0, 1, 1, 2], [0], [0]>} : vector<2x8x8xf32>, vector<2x8x8xf32>, vector<2x8x8xf32> -> vector<2x8x8xf32>
    "tpu.trace_stop"() : () -> ()
    %33 = vector.shape_cast %32 : vector<2x8x8xf32> to vector<16x8xf32>
    %c0_11 = arith.constant 0 : index
    %c0_12 = arith.constant 0 : index
    %34 = vector.load %arg6[%c0_11, %c0_12] : memref<16x32xf32, #tpu.memory_space<vmem>>, vector<16x8xf32>
    tpu.vector_store %arg6[%c0_11, %c0_12], %33 {strides = array<i32>} : memref<16x32xf32, #tpu.memory_space<vmem>>, vector<16x8xf32>,
    %35 = vector.extract_strided_slice %4 {offsets = [0, 8], sizes = [16, 8], strides = [1, 1]} : vector<16x96xf32> to vector<16x8xf32>
    %36 = vector.shape_cast %35 : vector<16x8xf32> to vector<2x8x8xf32>
    %37 = vector.extract_strided_slice %4 {offsets = [0, 40], sizes = [16, 8], strides = [1, 1]} : vector<16x96xf32> to vector<16x8xf32>
    %38 = vector.shape_cast %37 : vector<16x8xf32> to vector<2x8x8xf32>
    %39 = vector.extract_strided_slice %4 {offsets = [0, 72], sizes = [16, 8], strides = [1, 1]} : vector<16x96xf32> to vector<16x8xf32>
    %40 = vector.shape_cast %39 : vector<16x8xf32> to vector<2x8x8xf32>
    "tpu.trace_start"() <{level = 10 : i32, message = "bqd,bkd->bqk"}> : () -> ()
    %cst_13 = arith.constant dense<0.000000e+00> : vector<2x8x8xf32>
    %41 = tpu.matmul %36, %38, %cst_13 {dimension_numbers = #tpu.dot_dimension_numbers<[2], [2], [1], [1], [0, 0, 0, 1, 1, 1], [0], [0]>} : vector<2x8x8xf32>, vector<2x8x8xf32>, vector<2x8x8xf32> -> vector<2x8x8xf32>
    "tpu.trace_stop"() : () -> ()
    %42 = vector.broadcast %0 : f32 to vector<2x8x8xf32>
    %43 = arith.mulf %41, %42 : vector<2x8x8xf32>
    %cst_14 = arith.constant -1.000000e+30 : f32
    %44 = vector.shape_cast %8 : vector<1x8x8xi1> to vector<1x8x8xi1>
    %45 = vector.broadcast %44 : vector<1x8x8xi1> to vector<2x8x8xi1>
    %46 = vector.broadcast %cst_14 : f32 to vector<2x8x8xf32>
    %47 = arith.select %45, %43, %46 : vector<2x8x8xi1>, vector<2x8x8xf32>
    %cst_15 = arith.constant dense<0xFF800000> : vector<2x8xf32>
    %48 = vector.multi_reduction <maximumf>, %47, %cst_15 [2] : vector<2x8x8xf32> to vector<2x8xf32>
    %49 = vector.shape_cast %48 : vector<2x8xf32> to vector<2x8x1xf32>
    %50 = vector.broadcast %49 : vector<2x8x1xf32> to vector<2x8x8xf32>
    %51 = arith.subf %47, %50 : vector<2x8x8xf32>
    %52 = math.exp %51 : vector<2x8x8xf32>
    %cst_16 = arith.constant dense<0.000000e+00> : vector<2x8xf32>
    %53 = vector.multi_reduction <add>, %52, %cst_16 [2] : vector<2x8x8xf32> to vector<2x8xf32>
    %54 = vector.shape_cast %53 : vector<2x8xf32> to vector<2x8x1xf32>
    %55 = tpu.reciprocal %54 {approx = true} : vector<2x8x1xf32> -> vector<2x8x1xf32>
    %56 = vector.broadcast %55 : vector<2x8x1xf32> to vector<2x8x8xf32>
    %57 = arith.mulf %52, %56 : vector<2x8x8xf32>
    "tpu.trace_start"() <{level = 10 : i32, message = "bqk,bkd->bqd"}> : () -> ()
    %cst_17 = arith.constant dense<0.000000e+00> : vector<2x8x8xf32>
    %58 = tpu.matmul %57, %40, %cst_17 {dimension_numbers = #tpu.dot_dimension_numbers<[2], [1], [1], [2], [0, 0, 0, 1, 1, 2], [0], [0]>} : vector<2x8x8xf32>, vector<2x8x8xf32>, vector<2x8x8xf32> -> vector<2x8x8xf32>
    "tpu.trace_stop"() : () -> ()
    %59 = vector.shape_cast %58 : vector<2x8x8xf32> to vector<16x8xf32>
    %c0_18 = arith.constant 0 : index
    %c8 = arith.constant 8 : index
    %60 = vector.load %arg6[%c0_18, %c8] : memref<16x32xf32, #tpu.memory_space<vmem>>, vector<16x8xf32>
    tpu.vector_store %arg6[%c0_18, %c8], %59 {strides = array<i32>} : memref<16x32xf32, #tpu.memory_space<vmem>>, vector<16x8xf32>,
    %61 = vector.extract_strided_slice %4 {offsets = [0, 16], sizes = [16, 8], strides = [1, 1]} : vector<16x96xf32> to vector<16x8xf32>
    %62 = vector.shape_cast %61 : vector<16x8xf32> to vector<2x8x8xf32>
    %63 = vector.extract_strided_slice %4 {offsets = [0, 48], sizes = [16, 8], strides = [1, 1]} : vector<16x96xf32> to vector<16x8xf32>
    %64 = vector.shape_cast %63 : vector<16x8xf32> to vector<2x8x8xf32>
    %65 = vector.extract_strided_slice %4 {offsets = [0, 80], sizes = [16, 8], strides = [1, 1]} : vector<16x96xf32> to vector<16x8xf32>
    %66 = vector.shape_cast %65 : vector<16x8xf32> to vector<2x8x8xf32>
    "tpu.trace_start"() <{level = 10 : i32, message = "bqd,bkd->bqk"}> : () -> ()
    %cst_19 = arith.constant dense<0.000000e+00> : vector<2x8x8xf32>
    %67 = tpu.matmul %62, %64, %cst_19 {dimension_numbers = #tpu.dot_dimension_numbers<[2], [2], [1], [1], [0, 0, 0, 1, 1, 1], [0], [0]>} : vector<2x8x8xf32>, vector<2x8x8xf32>, vector<2x8x8xf32> -> vector<2x8x8xf32>
    "tpu.trace_stop"() : () -> ()
    %68 = vector.broadcast %0 : f32 to vector<2x8x8xf32>
    %69 = arith.mulf %67, %68 : vector<2x8x8xf32>
    %cst_20 = arith.constant -1.000000e+30 : f32
    %70 = vector.shape_cast %8 : vector<1x8x8xi1> to vector<1x8x8xi1>
    %71 = vector.broadcast %70 : vector<1x8x8xi1> to vector<2x8x8xi1>
    %72 = vector.broadcast %cst_20 : f32 to vector<2x8x8xf32>
    %73 = arith.select %71, %69, %72 : vector<2x8x8xi1>, vector<2x8x8xf32>
    %cst_21 = arith.constant dense<0xFF800000> : vector<2x8xf32>
    %74 = vector.multi_reduction <maximumf>, %73, %cst_21 [2] : vector<2x8x8xf32> to vector<2x8xf32>
    %75 = vector.shape_cast %74 : vector<2x8xf32> to vector<2x8x1xf32>
    %76 = vector.broadcast %75 : vector<2x8x1xf32> to vector<2x8x8xf32>
    %77 = arith.subf %73, %76 : vector<2x8x8xf32>
    %78 = math.exp %77 : vector<2x8x8xf32>
    %cst_22 = arith.constant dense<0.000000e+00> : vector<2x8xf32>
    %79 = vector.multi_reduction <add>, %78, %cst_22 [2] : vector<2x8x8xf32> to vector<2x8xf32>
    %80 = vector.shape_cast %79 : vector<2x8xf32> to vector<2x8x1xf32>
    %81 = tpu.reciprocal %80 {approx = true} : vector<2x8x1xf32> -> vector<2x8x1xf32>
    %82 = vector.broadcast %81 : vector<2x8x1xf32> to vector<2x8x8xf32>
    %83 = arith.mulf %78, %82 : vector<2x8x8xf32>
    "tpu.trace_start"() <{level = 10 : i32, message = "bqk,bkd->bqd"}> : () -> ()
    %cst_23 = arith.constant dense<0.000000e+00> : vector<2x8x8xf32>
    %84 = tpu.matmul %83, %66, %cst_23 {dimension_numbers = #tpu.dot_dimension_numbers<[2], [1], [1], [2], [0, 0, 0, 1, 1, 2], [0], [0]>} : vector<2x8x8xf32>, vector<2x8x8xf32>, vector<2x8x8xf32> -> vector<2x8x8xf32>
    "tpu.trace_stop"() : () -> ()
    %85 = vector.shape_cast %84 : vector<2x8x8xf32> to vector<16x8xf32>
    %c0_24 = arith.constant 0 : index
    %c16 = arith.constant 16 : index
    %86 = vector.load %arg6[%c0_24, %c16] : memref<16x32xf32, #tpu.memory_space<vmem>>, vector<16x8xf32>
    tpu.vector_store %arg6[%c0_24, %c16], %85 {strides = array<i32>} : memref<16x32xf32, #tpu.memory_space<vmem>>, vector<16x8xf32>,
    %87 = vector.extract_strided_slice %4 {offsets = [0, 24], sizes = [16, 8], strides = [1, 1]} : vector<16x96xf32> to vector<16x8xf32>
    %88 = vector.shape_cast %87 : vector<16x8xf32> to vector<2x8x8xf32>
    %89 = vector.extract_strided_slice %4 {offsets = [0, 56], sizes = [16, 8], strides = [1, 1]} : vector<16x96xf32> to vector<16x8xf32>
    %90 = vector.shape_cast %89 : vector<16x8xf32> to vector<2x8x8xf32>
    %91 = vector.extract_strided_slice %4 {offsets = [0, 88], sizes = [16, 8], strides = [1, 1]} : vector<16x96xf32> to vector<16x8xf32>
    %92 = vector.shape_cast %91 : vector<16x8xf32> to vector<2x8x8xf32>
    "tpu.trace_start"() <{level = 10 : i32, message = "bqd,bkd->bqk"}> : () -> ()
    %cst_25 = arith.constant dense<0.000000e+00> : vector<2x8x8xf32>
    %93 = tpu.matmul %88, %90, %cst_25 {dimension_numbers = #tpu.dot_dimension_numbers<[2], [2], [1], [1], [0, 0, 0, 1, 1, 1], [0], [0]>} : vector<2x8x8xf32>, vector<2x8x8xf32>, vector<2x8x8xf32> -> vector<2x8x8xf32>
    "tpu.trace_stop"() : () -> ()
    %94 = vector.broadcast %0 : f32 to vector<2x8x8xf32>
    %95 = arith.mulf %93, %94 : vector<2x8x8xf32>
    %cst_26 = arith.constant -1.000000e+30 : f32
    %96 = vector.shape_cast %8 : vector<1x8x8xi1> to vector<1x8x8xi1>
    %97 = vector.broadcast %96 : vector<1x8x8xi1> to vector<2x8x8xi1>
    %98 = vector.broadcast %cst_26 : f32 to vector<2x8x8xf32>
    %99 = arith.select %97, %95, %98 : vector<2x8x8xi1>, vector<2x8x8xf32>
    %cst_27 = arith.constant dense<0xFF800000> : vector<2x8xf32>
    %100 = vector.multi_reduction <maximumf>, %99, %cst_27 [2] : vector<2x8x8xf32> to vector<2x8xf32>
    %101 = vector.shape_cast %100 : vector<2x8xf32> to vector<2x8x1xf32>
    %102 = vector.broadcast %101 : vector<2x8x1xf32> to vector<2x8x8xf32>
    %103 = arith.subf %99, %102 : vector<2x8x8xf32>
    %104 = math.exp %103 : vector<2x8x8xf32>
    %cst_28 = arith.constant dense<0.000000e+00> : vector<2x8xf32>
    %105 = vector.multi_reduction <add>, %104, %cst_28 [2] : vector<2x8x8xf32> to vector<2x8xf32>
    %106 = vector.shape_cast %105 : vector<2x8xf32> to vector<2x8x1xf32>
    %107 = tpu.reciprocal %106 {approx = true} : vector<2x8x1xf32> -> vector<2x8x1xf32>
    %108 = vector.broadcast %107 : vector<2x8x1xf32> to vector<2x8x8xf32>
    %109 = arith.mulf %104, %108 : vector<2x8x8xf32>
    "tpu.trace_start"() <{level = 10 : i32, message = "bqk,bkd->bqd"}> : () -> ()
    %cst_29 = arith.constant dense<0.000000e+00> : vector<2x8x8xf32>
    %110 = tpu.matmul %109, %92, %cst_29 {dimension_numbers = #tpu.dot_dimension_numbers<[2], [1], [1], [2], [0, 0, 0, 1, 1, 2], [0], [0]>} : vector<2x8x8xf32>, vector<2x8x8xf32>, vector<2x8x8xf32> -> vector<2x8x8xf32>
    "tpu.trace_stop"() : () -> ()
    %111 = vector.shape_cast %110 : vector<2x8x8xf32> to vector<16x8xf32>
    %c0_30 = arith.constant 0 : index
    %c24 = arith.constant 24 : index
    %112 = vector.load %arg6[%c0_30, %c24] : memref<16x32xf32, #tpu.memory_space<vmem>>, vector<16x8xf32>
    tpu.vector_store %arg6[%c0_30, %c24], %111 {strides = array<i32>} : memref<16x32xf32, #tpu.memory_space<vmem>>, vector<16x8xf32>,
    %c0_31 = arith.constant 0 : index
    %c0_32 = arith.constant 0 : index
    %113 = vector.load %arg6[%c0_31, %c0_32] : memref<16x32xf32, #tpu.memory_space<vmem>>, vector<16x32xf32>
    %c0_33 = arith.constant 0 : index
    %c0_34 = arith.constant 0 : index
    %114 = vector.load %arg3[%c0_33, %c0_34] : memref<32x32xf32, #tpu.memory_space<vmem>>, vector<32x32xf32>
    %cst_35 = arith.constant dense<0.000000e+00> : vector<16x32xf32>
    %115 = tpu.matmul %113, %114, %cst_35 {dimension_numbers = #tpu.dot_dimension_numbers<[1], [0], [0], [1], [0, 0, 1, 1], [], []>} : vector<16x32xf32>, vector<32x32xf32>, vector<16x32xf32> -> vector<16x32xf32>
    %c0_36 = arith.constant 0 : index
    %c0_37 = arith.constant 0 : index
    %116 = vector.load %arg4[%c0_36, %c0_37] : memref<1x32xf32, #tpu.memory_space<vmem>>, vector<1x32xf32>
    %117 = vector.broadcast %116 : vector<1x32xf32> to vector<16x32xf32>
    %118 = arith.addf %115, %117 : vector<16x32xf32>
    %119 = vector.shape_cast %118 : vector<16x32xf32> to vector<2x8x32xf32>
    %c0_38 = arith.constant 0 : index
    %c0_39 = arith.constant 0 : index
    %c0_40 = arith.constant 0 : index
    %120 = vector.load %arg5[%c0_38, %c0_39, %c0_40] : memref<2x8x32xf32, #tpu.memory_space<vmem>>, vector<2x8x32xf32>
    tpu.vector_store %arg5[%c0_38, %c0_39, %c0_40], %119 {strides = array<i32>} : memref<2x8x32xf32, #tpu.memory_space<vmem>>, vector<2x8x32xf32>,
    return
  }
  func.func @transform_0(%arg0: i32) -> (i32, i32, i32) {
    %c0_i32 = arith.constant 0 : i32
    %c0_i32_0 = arith.constant 0 : i32
    %c0_i32_1 = arith.constant 0 : i32
    return %arg0, %c0_i32, %c0_i32_0 : i32, i32, i32
  }
  func.func @transform_1(%arg0: i32) -> (i32, i32) {
    %c0_i32 = arith.constant 0 : i32
    %c0_i32_0 = arith.constant 0 : i32
    %c0_i32_1 = arith.constant 0 : i32
    return %c0_i32, %c0_i32_0 : i32, i32
  }
  func.func @transform_2(%arg0: i32) -> (i32, i32) {
    %c0_i32 = arith.constant 0 : i32
    %c0_i32_0 = arith.constant 0 : i32
    %c0_i32_1 = arith.constant 0 : i32
    return %c0_i32, %c0_i32_0 : i32, i32
  }
  func.func @transform_3(%arg0: i32) -> (i32, i32) {
    %c0_i32 = arith.constant 0 : i32
    %c0_i32_0 = arith.constant 0 : i32
    %c0_i32_1 = arith.constant 0 : i32
    return %c0_i32, %c0_i32_0 : i32, i32
  }
  func.func @transform_4(%arg0: i32) -> (i32, i32, i32) {
    %c0_i32 = arith.constant 0 : i32
    %c0_i32_0 = arith.constant 0 : i32
    %c0_i32_1 = arith.constant 0 : i32
    return %arg0, %c0_i32, %c0_i32_0 : i32, i32, i32
  }
}

</mosaic_0001>

<llo_original>
// kernel: tpu_custom_call.1
$region0: #{tpu_custom_call.1}
  #allocation0 [shape = 'u32[]', space=smem, size = 0x4, offset = 0x4, fixed_abs, tag = 'smem constant byte address 0x4 - core index']
  #allocation1 [shape = 'u32[144,128]{1,0:T(1,128)}', space=vmem, size = 0x12000, scoped, tag = 'internal scratch']
  #allocation2 [shape = 'f32[16,32]{1,0:T(8,128)}', space=vmem, size = 0x2000, scoped, tag = 'scratch operand']
  %s0 = inlined_call_operand.hbm [shape: f32[2,8,32], index: 0, kind: input, shape index: {}]
  %s1 = inlined_call_operand.hbm [shape: f32[32,96], index: 1, kind: input, shape index: {}]
  %s2 = inlined_call_operand.hbm [shape: f32[32,32], index: 2, kind: input, shape index: {}]
  %s3 = inlined_call_operand.vmem [shape: f32[1,32], index: 3, kind: input, shape index: {}]
  %s4 = inlined_call_operand.hbm [shape: f32[2,8,32], index: 4, kind: output, shape index: {}]
  %s5 = sld [smem:[#allocation0]]
  $region38: #{tpu_custom_call.1} parent=0
    _
  %s7 = ssub.s32 1, %s5
  %s8 = scalar_select 0, %s7, %s5
  $region1: #{tpu_custom_call.1} parent=0
    #allocation3 [shape = 'u8[8192]{0}', space=vmem, size = 0x2000, scoped, tag = 'input window, operand 0, single buffered']
    #allocation4 [shape = 's32[1]{0}', space=sflag, size = 0x4, scoped, tag = 'scoped memory for tpu_custom_call.1']
    #allocation5 [shape = 's32[1]{0}', space=sflag, size = 0x4, scoped, tag = 'scoped memory for tpu_custom_call.1']
    #allocation6 [shape = 'u8[16384]{0}', space=vmem, size = 0x4000, scoped, tag = 'input window, operand 1, single buffered']
    #allocation7 [shape = 's32[1]{0}', space=sflag, size = 0x4, scoped, tag = 'scoped memory for tpu_custom_call.1']
    #allocation8 [shape = 'u8[16384]{0}', space=vmem, size = 0x4000, scoped, tag = 'input window, operand 2, single buffered']
    #allocation9 [shape = 'u8[8192]{0}', space=vmem, size = 0x2000, scoped, tag = 'output window, operand 0, single buffered']
    %9 = vsyncpa [#allocation4], 0
    %10 = vsyncpa [#allocation7], 0
    %11 = vsyncpa [#allocation5], 0
    // Predicated region
    $region2: #{tpu_custom_call.1} parent=1 // pred_check
      _
    $region3: #{tpu_custom_call.1} parent=1 // pred_check_branch
      %13 = sbr.rel (0) target = $region5
    $region4: #{tpu_custom_call.1} parent=1 // pred_region
      %s15 = ssub.s32 256, 256
      %16 = vsyncadd [#allocation4], %s15
      %s17 = sshll.u32 [#allocation3], 4
      %s18 = int_to_ptr.vmem [resolvable:$true] %s17
      %23 = dma.hbm_to_vmem [thread:$0]  %s0, 256, %s18, [#allocation4], 128, 128, 8
    $region5: #{tpu_custom_call.1} parent=1 // pred_fallthru
      _
    // Predicated region
    $region6: #{tpu_custom_call.1} parent=1 // pred_check
      _
    $region7: #{tpu_custom_call.1} parent=1 // pred_check_branch
      %25 = sbr.rel (0) target = $region9
    $region8: #{tpu_custom_call.1} parent=1 // pred_region
      %s27 = ssub.s32 512, 512
      %28 = vsyncadd [#allocation7], %s27
      %s29 = sshll.u32 [#allocation6], 4
      %s30 = int_to_ptr.vmem [resolvable:$true] %s29
      %35 = dma.hbm_to_vmem [thread:$0]  %s1, 512, %s30, [#allocation7], 128, 128, 8
    $region9: #{tpu_custom_call.1} parent=1 // pred_fallthru
      _
    // Predicated region
    $region10: #{tpu_custom_call.1} parent=1 // pred_check
      _
    $region11: #{tpu_custom_call.1} parent=1 // pred_check_branch
      %37 = sbr.rel (0) target = $region13
    $region12: #{tpu_custom_call.1} parent=1 // pred_region
      %s39 = ssub.s32 512, 512
      %40 = vsyncadd [#allocation7], %s39
      %s41 = sshll.u32 [#allocation8], 4
      %s42 = int_to_ptr.vmem [resolvable:$true] %s41
      %47 = dma.hbm_to_vmem [thread:$0]  %s2, 512, %s42, [#allocation7], 128, 128, 8
    $region13: #{tpu_custom_call.1} parent=1 // pred_fallthru
      _
    // Predicated region
    $region14: #{tpu_custom_call.1} parent=1 // pred_check
      _
    $region15: #{tpu_custom_call.1} parent=1 // pred_check_branch
      %49 = sbr.rel (0) target = $region17
    $region16: #{tpu_custom_call.1} parent=1 // pred_region
      _
    $region17: #{tpu_custom_call.1} parent=1 // pred_fallthru
      _
    // Predicated region
    $region18: #{tpu_custom_call.1} parent=1 // pred_check
      _
    $region19: #{tpu_custom_call.1} parent=1 // pred_check_branch
      %51 = sbr.rel (0) target = $region21
    $region20: #{tpu_custom_call.1} parent=1 // pred_region
      %52 = dma.done [#allocation4], 256
    $region21: #{tpu_custom_call.1} parent=1 // pred_fallthru
      _
    // Predicated region
    $region22: #{tpu_custom_call.1} parent=1 // pred_check
      _
    $region23: #{tpu_custom_call.1} parent=1 // pred_check_branch
      %54 = sbr.rel (0) target = $region25
    $region24: #{tpu_custom_call.1} parent=1 // pred_region
      %55 = dma.done [#allocation7], 512
    $region25: #{tpu_custom_call.1} parent=1 // pred_fallthru
      _
    // Predicated region
    $region26: #{tpu_custom_call.1} parent=1 // pred_check
      _
    $region27: #{tpu_custom_call.1} parent=1 // pred_check_branch
      %57 = sbr.rel (0) target = $region29
    $region28: #{tpu_custom_call.1} parent=1 // pred_region
      %58 = dma.done [#allocation7], 512
    $region29: #{tpu_custom_call.1} parent=1 // pred_fallthru
      _
    %v59 = vld [vmem:[#allocation3] sm:$0xff]
    %v60 = vld [vmem:[#allocation3 + $0x8] sm:$0xff]
    %v61 = vld [vmem:[#allocation6] sm:$0xff]
    %v62 = vld [vmem:[#allocation6 + $0x8] sm:$0xff]
    %v63 = vld [vmem:[#allocation6 + $0x10] sm:$0xff]
    %v64 = vld [vmem:[#allocation6 + $0x18] sm:$0xff]
    %vm65 = vcmask 261120
    %v67 = vsel %vm65, %v59, 0
    %v70 = vsel %vm65, %v60, 0
    %72 = vmatprep.subr.mxu0 0.0
    %73 = vmatpush1.msra.mxu0 %v61
    %74 = vmatprep.subr.mxu0 0.0
    %75 = vmatpush1.msra.mxu0 %v62
    %76 = vmatprep.subr.mxu0 0.0
    %77 = vmatpush1.msra.mxu0 %v63
    %78 = vmatprep.subr.mxu0 0.0
    %79 = vmatpush1.msra.mxu0 %v64
    %80 = vmatprep.subr.mxu0 0.0
    %81 = vmatpush1.msra.mxu0 0.0
    %82 = vmatprep.subr.mxu0 0.0
    %83 = vmatpush1.msra.mxu0 0.0
    %84 = vmatprep.subr.mxu0 0.0
    %85 = vmatpush1.msra.mxu0 0.0
    %86 = vmatprep.subr.mxu0 0.0
    %87 = vmatpush1.msra.mxu0 0.0
    %88 = vmatprep.subr.mxu0 0.0
    %89 = vmatpush1.msra.mxu0 0.0
    %90 = vmatprep.subr.mxu0 0.0
    %91 = vmatpush1.msra.mxu0 0.0
    %92 = vmatprep.subr.mxu0 0.0
    %93 = vmatpush1.msra.mxu0 0.0
    %94 = vmatprep.subr.mxu0 0.0
    %95 = vmatpush1.msra.mxu0 0.0
    %96 = vmatprep.subr.mxu0 0.0
    %97 = vmatpush1.msra.mxu0 0.0
    %98 = vmatprep.subr.mxu0 0.0
    %99 = vmatpush1.msra.mxu0 0.0
    %100 = vmatprep.subr.mxu0 0.0
    %101 = vmatpush1.msra.mxu0 0.0
    %102 = vmatprep.subr.mxu0 0.0
    %103 = vmatpush1.msra.mxu0 0.0
    %104 = vmatprep.subr.mxu0 0.0
    %105 = vmatpush1.msra.mxu0 0.0
    %106 = vmatprep.subr.mxu0 0.0
    %107 = vmatpush1.msra.mxu0 0.0
    %108 = vmatprep.subr.mxu0 0.0
    %109 = vmatpush1.msra.mxu0 0.0
    %110 = vmatprep.subr.mxu0 0.0
    %111 = vmatpush1.msra.mxu0 0.0
    %112 = vmatprep.subr.mxu0 0.0
    %113 = vmatpush1.msra.mxu0 0.0
    %114 = vmatprep.subr.mxu0 0.0
    %115 = vmatpush1.msra.mxu0 0.0
    %116 = vmatprep.subr.mxu0 0.0
    %117 = vmatpush1.msra.mxu0 0.0
    %118 = vmatprep.subr.mxu0 0.0
    %119 = vmatpush1.msra.mxu0 0.0
    %120 = vmatprep.subr.mxu0 0.0
    %121 = vmatpush1.msra.mxu0 0.0
    %122 = vmatprep.subr.mxu0 0.0
    %123 = vmatpush1.msra.mxu0 0.0
    %124 = vmatprep.subr.mxu0 0.0
    %125 = vmatpush1.msra.mxu0 0.0
    %126 = vmatprep.subr.mxu0 0.0
    %127 = vmatpush1.msra.mxu0 0.0
    %128 = vmatprep.subr.mxu0 0.0
    %129 = vmatpush1.msra.mxu0 0.0
    %130 = vmatprep.subr.mxu0 0.0
    %131 = vmatpush1.msra.mxu0 0.0
    %132 = vmatprep.subr.mxu0 0.0
    %133 = vmatpush1.msra.mxu0 0.0
    %134 = vmatprep.subr.mxu0 0.0
    %135 = vmatpush1.msra.mxu0 0.0
    %136 = vmatprep.mubr.f32.mxu0 0.0
    %137 = vmatmul.mubr.f32.gmra.mrb[0].mxu0 %v67
    %v138 = vpop.f32.mrb[0].mxu0
    %v139 = vadd.f32 0.0, %v138
    %v140 = vpop.f32.mrb[0].mxu0
    %141 = vmatprep.mubr.f32.mxu0 0.0
    %142 = vmatmul.mubr.f32.gmra.mrb[0].mxu0 %v70
    %v143 = vpop.f32.mrb[0].mxu0
    %v144 = vadd.f32 0.0, %v143
    %v145 = vpop.f32.mrb[0].mxu0
    %146 = vdwg.mxu0
    %v147 = vlaneseq
    %v148 = vshrl.u32 %v147, 7
    %v149 = vlaneseq
    %v150 = vand.u32 %v149, 127
    %vm151 = vcmp.ge.s32.totalorder %v148, %v150
    %153 = vrot.lane.b32.xlu0 %v139, 96
    %v154 = vpop.permute.xlu0 %153
    %vm155 = vcmask 64512
    %v156 = vsel %vm155, %v139, 0
    %v158 = vsel %vm155, %v154, 0
    %160 = vmatprep.subr.mxu0 0.0
    %161 = vmatpush1.xpose.msra.mxu0 %v158
    %162 = vmatprep.subr.mxu0 0.0
    %163 = vmatpush1.xpose.msra.mxu0 0.0
    %164 = vmatprep.subr.mxu0 0.0
    %165 = vmatpush1.xpose.msra.mxu0 0.0
    %166 = vmatprep.subr.mxu0 0.0
    %167 = vmatpush1.xpose.msra.mxu0 0.0
    %168 = vmatprep.subr.mxu0 0.0
    %169 = vmatpush1.xpose.msra.mxu0 0.0
    %170 = vmatprep.subr.mxu0 0.0
    %171 = vmatpush1.xpose.msra.mxu0 0.0
    %172 = vmatprep.subr.mxu0 0.0
    %173 = vmatpush1.xpose.msra.mxu0 0.0
    %174 = vmatprep.subr.mxu0 0.0
    %175 = vmatpush1.xpose.msra.mxu0 0.0
    %176 = vmatprep.subr.mxu0 0.0
    %177 = vmatpush1.xpose.msra.mxu0 0.0
    %178 = vmatprep.subr.mxu0 0.0
    %179 = vmatpush1.xpose.msra.mxu0 0.0
    %180 = vmatprep.subr.mxu0 0.0
    %181 = vmatpush1.xpose.msra.mxu0 0.0
    %182 = vmatprep.subr.mxu0 0.0
    %183 = vmatpush1.xpose.msra.mxu0 0.0
    %184 = vmatprep.subr.mxu0 0.0
    %185 = vmatpush1.xpose.msra.mxu0 0.0
    %186 = vmatprep.subr.mxu0 0.0
    %187 = vmatpush1.xpose.msra.mxu0 0.0
    %188 = vmatprep.subr.mxu0 0.0
    %189 = vmatpush1.xpose.msra.mxu0 0.0
    %190 = vmatprep.subr.mxu0 0.0
    %191 = vmatpush1.xpose.msra.mxu0 0.0
    %192 = vmatprep.subr.mxu0 0.0
    %193 = vmatpush1.xpose.msra.mxu0 0.0
    %194 = vmatprep.subr.mxu0 0.0
    %195 = vmatpush1.xpose.msra.mxu0 0.0
    %196 = vmatprep.subr.mxu0 0.0
    %197 = vmatpush1.xpose.msra.mxu0 0.0
    %198 = vmatprep.subr.mxu0 0.0
    %199 = vmatpush1.xpose.msra.mxu0 0.0
    %200 = vmatprep.subr.mxu0 0.0
    %201 = vmatpush1.xpose.msra.mxu0 0.0
    %202 = vmatprep.subr.mxu0 0.0
    %203 = vmatpush1.xpose.msra.mxu0 0.0
    %204 = vmatprep.subr.mxu0 0.0
    %205 = vmatpush1.xpose.msra.mxu0 0.0
    %206 = vmatprep.subr.mxu0 0.0
    %207 = vmatpush1.xpose.msra.mxu0 0.0
    %208 = vmatprep.subr.mxu0 0.0
    %209 = vmatpush1.xpose.msra.mxu0 0.0
    %210 = vmatprep.subr.mxu0 0.0
    %211 = vmatpush1.xpose.msra.mxu0 0.0
    %212 = vmatprep.subr.mxu0 0.0
    %213 = vmatpush1.xpose.msra.mxu0 0.0
    %214 = vmatprep.subr.mxu0 0.0
    %215 = vmatpush1.xpose.msra.mxu0 0.0
    %216 = vmatprep.subr.mxu0 0.0
    %217 = vmatpush1.xpose.msra.mxu0 0.0
    %218 = vmatprep.subr.mxu0 0.0
    %219 = vmatpush1.xpose.msra.mxu0 0.0
    %220 = vmatprep.subr.mxu0 0.0
    %221 = vmatpush1.xpose.msra.mxu0 0.0
    %222 = vmatprep.subr.mxu0 0.0
    %223 = vmatpush1.xpose.msra.mxu0 0.0
    %224 = vmatprep.mubr.f32.mxu0 0.0
    %225 = vmatmul.mubr.f32.gmra.mrb[0].mxu0 %v156
    %v226 = vpop.f32.mrb[0].mxu0
    %v227 = vadd.f32 0.0, %v226
    %v228 = vpop.f32.mrb[0].mxu0
    %229 = vdwg.mxu0
    %231 = vrot.lane.b32.xlu0 %v144, 96
    %v232 = vpop.permute.xlu0 %231
    %v233 = vsel %vm155, %v144, 0
    %v235 = vsel %vm155, %v232, 0
    %237 = vmatprep.subr.mxu0 0.0
    %238 = vmatpush1.xpose.msra.mxu0 %v235
    %239 = vmatprep.subr.mxu0 0.0
    %240 = vmatpush1.xpose.msra.mxu0 0.0
    %241 = vmatprep.subr.mxu0 0.0
    %242 = vmatpush1.xpose.msra.mxu0 0.0
    %243 = vmatprep.subr.mxu0 0.0
    %244 = vmatpush1.xpose.msra.mxu0 0.0
    %245 = vmatprep.subr.mxu0 0.0
    %246 = vmatpush1.xpose.msra.mxu0 0.0
    %247 = vmatprep.subr.mxu0 0.0
    %248 = vmatpush1.xpose.msra.mxu0 0.0
    %249 = vmatprep.subr.mxu0 0.0
    %250 = vmatpush1.xpose.msra.mxu0 0.0
    %251 = vmatprep.subr.mxu0 0.0
    %252 = vmatpush1.xpose.msra.mxu0 0.0
    %253 = vmatprep.subr.mxu0 0.0
    %254 = vmatpush1.xpose.msra.mxu0 0.0
    %255 = vmatprep.subr.mxu0 0.0
    %256 = vmatpush1.xpose.msra.mxu0 0.0
    %257 = vmatprep.subr.mxu0 0.0
    %258 = vmatpush1.xpose.msra.mxu0 0.0
    %259 = vmatprep.subr.mxu0 0.0
    %260 = vmatpush1.xpose.msra.mxu0 0.0
    %261 = vmatprep.subr.mxu0 0.0
    %262 = vmatpush1.xpose.msra.mxu0 0.0
    %263 = vmatprep.subr.mxu0 0.0
    %264 = vmatpush1.xpose.msra.mxu0 0.0
    %265 = vmatprep.subr.mxu0 0.0
    %266 = vmatpush1.xpose.msra.mxu0 0.0
    %267 = vmatprep.subr.mxu0 0.0
    %268 = vmatpush1.xpose.msra.mxu0 0.0
    %269 = vmatprep.subr.mxu0 0.0
    %270 = vmatpush1.xpose.msra.mxu0 0.0
    %271 = vmatprep.subr.mxu0 0.0
    %272 = vmatpush1.xpose.msra.mxu0 0.0
    %273 = vmatprep.subr.mxu0 0.0
    %274 = vmatpush1.xpose.msra.mxu0 0.0
    %275 = vmatprep.subr.mxu0 0.0
    %276 = vmatpush1.xpose.msra.mxu0 0.0
    %277 = vmatprep.subr.mxu0 0.0
    %278 = vmatpush1.xpose.msra.mxu0 0.0
    %279 = vmatprep.subr.mxu0 0.0
    %280 = vmatpush1.xpose.msra.mxu0 0.0
    %281 = vmatprep.subr.mxu0 0.0
    %282 = vmatpush1.xpose.msra.mxu0 0.0
    %283 = vmatprep.subr.mxu0 0.0
    %284 = vmatpush1.xpose.msra.mxu0 0.0
    %285 = vmatprep.subr.mxu0 0.0
    %286 = vmatpush1.xpose.msra.mxu0 0.0
    %287 = vmatprep.subr.mxu0 0.0
    %288 = vmatpush1.xpose.msra.mxu0 0.0
    %289 = vmatprep.subr.mxu0 0.0
    %290 = vmatpush1.xpose.msra.mxu0 0.0
    %291 = vmatprep.subr.mxu0 0.0
    %292 = vmatpush1.xpose.msra.mxu0 0.0
    %293 = vmatprep.subr.mxu0 0.0
    %294 = vmatpush1.xpose.msra.mxu0 0.0
    %295 = vmatprep.subr.mxu0 0.0
    %296 = vmatpush1.xpose.msra.mxu0 0.0
    %297 = vmatprep.subr.mxu0 0.0
    %298 = vmatpush1.xpose.msra.mxu0 0.0
    %299 = vmatprep.subr.mxu0 0.0
    %300 = vmatpush1.xpose.msra.mxu0 0.0
    %301 = vmatprep.mubr.f32.mxu0 0.0
    %302 = vmatmul.mubr.f32.gmra.mrb[0].mxu0 %v233
    %v303 = vpop.f32.mrb[0].mxu0
    %v304 = vadd.f32 0.0, %v303
    %v305 = vpop.f32.mrb[0].mxu0
    %306 = vdwg.mxu0
    %v307 = vmul.f32 %v227, 0.17677669
    %v308 = vmul.f32 %v304, 0.17677669
    %v309 = vsel %vm151, 1, 0
    %vm310 = vcmp.eq.s32.totalorder %v309, 1
    %v311 = vsel %vm310, %v307, -1e+30
    %v312 = vsel %vm310, %v308, -1e+30
    %v313 = vsel %vm155, %v311, -inf
    %314 = vmax.xlane.f32.xlu0 %v313
    %v315 = vpop.xlane.xlu0 %314
    %v316 = vsel %vm155, %v312, -inf
    %317 = vmax.xlane.f32.xlu0 %v316
    %v318 = vpop.xlane.xlu0 %317
    %v319 = vsub.f32 %v311, %v315
    %v320 = vsub.f32 %v312, %v318
    %v321 = vmul.f32 %v319, 1.442695
    %v322 = vpow.pop %v321
    %v323 = vmul.f32 %v320, 1.442695
    %v324 = vpow.pop %v323
    %v325 = vsel %vm155, %v322, 0.0
    %326 = vadd.xlane.f32.xlu0 %v325
    %v327 = vpop.xlane.xlu0 %326
    %v328 = vsel %vm155, %v324, 0.0
    %329 = vadd.xlane.f32.xlu0 %v328
    %v330 = vpop.xlane.xlu0 %329
    %v331 = vrcp.pop %v327
    %v332 = vrcp.pop %v330
    %v333 = vmul.f32 %v322, %v331
    %v334 = vmul.f32 %v324, %v332
    %335 = vrot.lane.b32.xlu0 %v139, 64
    %v336 = vpop.permute.xlu0 %335
    %v339 = vsel %vm155, %v333, 0
    %341 = vmatprep.subr.mxu0 0.0
    %342 = vmatpush1.msra.mxu0 %v336
    %343 = vmatprep.subr.mxu0 0.0
    %344 = vmatpush1.msra.mxu0 0.0
    %345 = vmatprep.subr.mxu0 0.0
    %346 = vmatpush1.msra.mxu0 0.0
    %347 = vmatprep.subr.mxu0 0.0
    %348 = vmatpush1.msra.mxu0 0.0
    %349 = vmatprep.subr.mxu0 0.0
    %350 = vmatpush1.msra.mxu0 0.0
    %351 = vmatprep.subr.mxu0 0.0
    %352 = vmatpush1.msra.mxu0 0.0
    %353 = vmatprep.subr.mxu0 0.0
    %354 = vmatpush1.msra.mxu0 0.0
    %355 = vmatprep.subr.mxu0 0.0
    %356 = vmatpush1.msra.mxu0 0.0
    %357 = vmatprep.subr.mxu0 0.0
    %358 = vmatpush1.msra.mxu0 0.0
    %359 = vmatprep.subr.mxu0 0.0
    %360 = vmatpush1.msra.mxu0 0.0
    %361 = vmatprep.subr.mxu0 0.0
    %362 = vmatpush1.msra.mxu0 0.0
    %363 = vmatprep.subr.mxu0 0.0
    %364 = vmatpush1.msra.mxu0 0.0
    %365 = vmatprep.subr.mxu0 0.0
    %366 = vmatpush1.msra.mxu0 0.0
    %367 = vmatprep.subr.mxu0 0.0
    %368 = vmatpush1.msra.mxu0 0.0
    %369 = vmatprep.subr.mxu0 0.0
    %370 = vmatpush1.msra.mxu0 0.0
    %371 = vmatprep.subr.mxu0 0.0
    %372 = vmatpush1.msra.mxu0 0.0
    %373 = vmatprep.subr.mxu0 0.0
    %374 = vmatpush1.msra.mxu0 0.0
    %375 = vmatprep.subr.mxu0 0.0
    %376 = vmatpush1.msra.mxu0 0.0
    %377 = vmatprep.subr.mxu0 0.0
    %378 = vmatpush1.msra.mxu0 0.0
    %379 = vmatprep.subr.mxu0 0.0
    %380 = vmatpush1.msra.mxu0 0.0
    %381 = vmatprep.subr.mxu0 0.0
    %382 = vmatpush1.msra.mxu0 0.0
    %383 = vmatprep.subr.mxu0 0.0
    %384 = vmatpush1.msra.mxu0 0.0
    %385 = vmatprep.subr.mxu0 0.0
    %386 = vmatpush1.msra.mxu0 0.0
    %387 = vmatprep.subr.mxu0 0.0
    %388 = vmatpush1.msra.mxu0 0.0
    %389 = vmatprep.subr.mxu0 0.0
    %390 = vmatpush1.msra.mxu0 0.0
    %391 = vmatprep.subr.mxu0 0.0
    %392 = vmatpush1.msra.mxu0 0.0
    %393 = vmatprep.subr.mxu0 0.0
    %394 = vmatpush1.msra.mxu0 0.0
    %395 = vmatprep.subr.mxu0 0.0
    %396 = vmatpush1.msra.mxu0 0.0
    %397 = vmatprep.subr.mxu0 0.0
    %398 = vmatpush1.msra.mxu0 0.0
    %399 = vmatprep.subr.mxu0 0.0
    %400 = vmatpush1.msra.mxu0 0.0
    %401 = vmatprep.subr.mxu0 0.0
    %402 = vmatpush1.msra.mxu0 0.0
    %403 = vmatprep.subr.mxu0 0.0
    %404 = vmatpush1.msra.mxu0 0.0
    %405 = vmatprep.mubr.f32.mxu0 0.0
    %406 = vmatmul.mubr.f32.gmra.mrb[0].mxu0 %v339
    %v407 = vpop.f32.mrb[0].mxu0
    %v408 = vadd.f32 0.0, %v407
    %v409 = vpop.f32.mrb[0].mxu0
    %410 = vdwg.mxu0
    %411 = vrot.lane.b32.xlu0 %v144, 64
    %v412 = vpop.permute.xlu0 %411
    %v415 = vsel %vm155, %v334, 0
    %417 = vmatprep.subr.mxu0 0.0
    %418 = vmatpush1.msra.mxu0 %v412
    %419 = vmatprep.subr.mxu0 0.0
    %420 = vmatpush1.msra.mxu0 0.0
    %421 = vmatprep.subr.mxu0 0.0
    %422 = vmatpush1.msra.mxu0 0.0
    %423 = vmatprep.subr.mxu0 0.0
    %424 = vmatpush1.msra.mxu0 0.0
    %425 = vmatprep.subr.mxu0 0.0
    %426 = vmatpush1.msra.mxu0 0.0
    %427 = vmatprep.subr.mxu0 0.0
    %428 = vmatpush1.msra.mxu0 0.0
    %429 = vmatprep.subr.mxu0 0.0
    %430 = vmatpush1.msra.mxu0 0.0
    %431 = vmatprep.subr.mxu0 0.0
    %432 = vmatpush1.msra.mxu0 0.0
    %433 = vmatprep.subr.mxu0 0.0
    %434 = vmatpush1.msra.mxu0 0.0
    %435 = vmatprep.subr.mxu0 0.0
    %436 = vmatpush1.msra.mxu0 0.0
    %437 = vmatprep.subr.mxu0 0.0
    %438 = vmatpush1.msra.mxu0 0.0
    %439 = vmatprep.subr.mxu0 0.0
    %440 = vmatpush1.msra.mxu0 0.0
    %441 = vmatprep.subr.mxu0 0.0
    %442 = vmatpush1.msra.mxu0 0.0
    %443 = vmatprep.subr.mxu0 0.0
    %444 = vmatpush1.msra.mxu0 0.0
    %445 = vmatprep.subr.mxu0 0.0
    %446 = vmatpush1.msra.mxu0 0.0
    %447 = vmatprep.subr.mxu0 0.0
    %448 = vmatpush1.msra.mxu0 0.0
    %449 = vmatprep.subr.mxu0 0.0
    %450 = vmatpush1.msra.mxu0 0.0
    %451 = vmatprep.subr.mxu0 0.0
    %452 = vmatpush1.msra.mxu0 0.0
    %453 = vmatprep.subr.mxu0 0.0
    %454 = vmatpush1.msra.mxu0 0.0
    %455 = vmatprep.subr.mxu0 0.0
    %456 = vmatpush1.msra.mxu0 0.0
    %457 = vmatprep.subr.mxu0 0.0
    %458 = vmatpush1.msra.mxu0 0.0
    %459 = vmatprep.subr.mxu0 0.0
    %460 = vmatpush1.msra.mxu0 0.0
    %461 = vmatprep.subr.mxu0 0.0
    %462 = vmatpush1.msra.mxu0 0.0
    %463 = vmatprep.subr.mxu0 0.0
    %464 = vmatpush1.msra.mxu0 0.0
    %465 = vmatprep.subr.mxu0 0.0
    %466 = vmatpush1.msra.mxu0 0.0
    %467 = vmatprep.subr.mxu0 0.0
    %468 = vmatpush1.msra.mxu0 0.0
    %469 = vmatprep.subr.mxu0 0.0
    %470 = vmatpush1.msra.mxu0 0.0
    %471 = vmatprep.subr.mxu0 0.0
    %472 = vmatpush1.msra.mxu0 0.0
    %473 = vmatprep.subr.mxu0 0.0
    %474 = vmatpush1.msra.mxu0 0.0
    %475 = vmatprep.subr.mxu0 0.0
    %476 = vmatpush1.msra.mxu0 0.0
    %477 = vmatprep.subr.mxu0 0.0
    %478 = vmatpush1.msra.mxu0 0.0
    %479 = vmatprep.subr.mxu0 0.0
    %480 = vmatpush1.msra.mxu0 0.0
    %481 = vmatprep.mubr.f32.mxu0 0.0
    %482 = vmatmul.mubr.f32.gmra.mrb[0].mxu0 %v415
    %v483 = vpop.f32.mrb[0].mxu0
    %v484 = vadd.f32 0.0, %v483
    %v485 = vpop.f32.mrb[0].mxu0
    %486 = vdwg.mxu0
    %487 = vst.msk [vmem:[#allocation2] sm:$0xff] %vm155, %v408
    %488 = vst.msk [vmem:[#allocation2 + $0x8] sm:$0xff] %vm155, %v484
    %489 = vrot.lane.b32.xlu0 %v139, 120
    %v490 = vpop.permute.xlu0 %489
    %491 = vrot.lane.b32.xlu0 %v139, 88
    %v492 = vpop.permute.xlu0 %491
    %v493 = vsel %vm155, %v490, 0
    %v495 = vsel %vm155, %v492, 0
    %497 = vmatprep.subr.mxu0 0.0
    %498 = vmatpush1.xpose.msra.mxu0 %v495
    %499 = vmatprep.subr.mxu0 0.0
    %500 = vmatpush1.xpose.msra.mxu0 0.0
    %501 = vmatprep.subr.mxu0 0.0
    %502 = vmatpush1.xpose.msra.mxu0 0.0
    %503 = vmatprep.subr.mxu0 0.0
    %504 = vmatpush1.xpose.msra.mxu0 0.0
    %505 = vmatprep.subr.mxu0 0.0
    %506 = vmatpush1.xpose.msra.mxu0 0.0
    %507 = vmatprep.subr.mxu0 0.0
    %508 = vmatpush1.xpose.msra.mxu0 0.0
    %509 = vmatprep.subr.mxu0 0.0
    %510 = vmatpush1.xpose.msra.mxu0 0.0
    %511 = vmatprep.subr.mxu0 0.0
    %512 = vmatpush1.xpose.msra.mxu0 0.0
    %513 = vmatprep.subr.mxu0 0.0
    %514 = vmatpush1.xpose.msra.mxu0 0.0
    %515 = vmatprep.subr.mxu0 0.0
    %516 = vmatpush1.xpose.msra.mxu0 0.0
    %517 = vmatprep.subr.mxu0 0.0
    %518 = vmatpush1.xpose.msra.mxu0 0.0
    %519 = vmatprep.subr.mxu0 0.0
    %520 = vmatpush1.xpose.msra.mxu0 0.0
    %521 = vmatprep.subr.mxu0 0.0
    %522 = vmatpush1.xpose.msra.mxu0 0.0
    %523 = vmatprep.subr.mxu0 0.0
    %524 = vmatpush1.xpose.msra.mxu0 0.0
    %525 = vmatprep.subr.mxu0 0.0
    %526 = vmatpush1.xpose.msra.mxu0 0.0
    %527 = vmatprep.subr.mxu0 0.0
    %528 = vmatpush1.xpose.msra.mxu0 0.0
    %529 = vmatprep.subr.mxu0 0.0
    %530 = vmatpush1.xpose.msra.mxu0 0.0
    %531 = vmatprep.subr.mxu0 0.0
    %532 = vmatpush1.xpose.msra.mxu0 0.0
    %533 = vmatprep.subr.mxu0 0.0
    %534 = vmatpush1.xpose.msra.mxu0 0.0
    %535 = vmatprep.subr.mxu0 0.0
    %536 = vmatpush1.xpose.msra.mxu0 0.0
    %537 = vmatprep.subr.mxu0 0.0
    %538 = vmatpush1.xpose.msra.mxu0 0.0
    %539 = vmatprep.subr.mxu0 0.0
    %540 = vmatpush1.xpose.msra.mxu0 0.0
    %541 = vmatprep.subr.mxu0 0.0
    %542 = vmatpush1.xpose.msra.mxu0 0.0
    %543 = vmatprep.subr.mxu0 0.0
    %544 = vmatpush1.xpose.msra.mxu0 0.0
    %545 = vmatprep.subr.mxu0 0.0
    %546 = vmatpush1.xpose.msra.mxu0 0.0
    %547 = vmatprep.subr.mxu0 0.0
    %548 = vmatpush1.xpose.msra.mxu0 0.0
    %549 = vmatprep.subr.mxu0 0.0
    %550 = vmatpush1.xpose.msra.mxu0 0.0
    %551 = vmatprep.subr.mxu0 0.0
    %552 = vmatpush1.xpose.msra.mxu0 0.0
    %553 = vmatprep.subr.mxu0 0.0
    %554 = vmatpush1.xpose.msra.mxu0 0.0
    %555 = vmatprep.subr.mxu0 0.0
    %556 = vmatpush1.xpose.msra.mxu0 0.0
    %557 = vmatprep.subr.mxu0 0.0
    %558 = vmatpush1.xpose.msra.mxu0 0.0
    %559 = vmatprep.subr.mxu0 0.0
    %560 = vmatpush1.xpose.msra.mxu0 0.0
    %561 = vmatprep.mubr.f32.mxu0 0.0
    %562 = vmatmul.mubr.f32.gmra.mrb[0].mxu0 %v493
    %v563 = vpop.f32.mrb[0].mxu0
    %v564 = vadd.f32 0.0, %v563
    %v565 = vpop.f32.mrb[0].mxu0
    %566 = vdwg.mxu0
    %567 = vrot.lane.b32.xlu0 %v144, 120
    %v568 = vpop.permute.xlu0 %567
    %569 = vrot.lane.b32.xlu0 %v144, 88
    %v570 = vpop.permute.xlu0 %569
    %v571 = vsel %vm155, %v568, 0
    %v573 = vsel %vm155, %v570, 0
    %575 = vmatprep.subr.mxu0 0.0
    %576 = vmatpush1.xpose.msra.mxu0 %v573
    %577 = vmatprep.subr.mxu0 0.0
    %578 = vmatpush1.xpose.msra.mxu0 0.0
    %579 = vmatprep.subr.mxu0 0.0
    %580 = vmatpush1.xpose.msra.mxu0 0.0
    %581 = vmatprep.subr.mxu0 0.0
    %582 = vmatpush1.xpose.msra.mxu0 0.0
    %583 = vmatprep.subr.mxu0 0.0
    %584 = vmatpush1.xpose.msra.mxu0 0.0
    %585 = vmatprep.subr.mxu0 0.0
    %586 = vmatpush1.xpose.msra.mxu0 0.0
    %587 = vmatprep.subr.mxu0 0.0
    %588 = vmatpush1.xpose.msra.mxu0 0.0
    %589 = vmatprep.subr.mxu0 0.0
    %590 = vmatpush1.xpose.msra.mxu0 0.0
    %591 = vmatprep.subr.mxu0 0.0
    %592 = vmatpush1.xpose.msra.mxu0 0.0
    %593 = vmatprep.subr.mxu0 0.0
    %594 = vmatpush1.xpose.msra.mxu0 0.0
    %595 = vmatprep.subr.mxu0 0.0
    %596 = vmatpush1.xpose.msra.mxu0 0.0
    %597 = vmatprep.subr.mxu0 0.0
    %598 = vmatpush1.xpose.msra.mxu0 0.0
    %599 = vmatprep.subr.mxu0 0.0
    %600 = vmatpush1.xpose.msra.mxu0 0.0
    %601 = vmatprep.subr.mxu0 0.0
    %602 = vmatpush1.xpose.msra.mxu0 0.0
    %603 = vmatprep.subr.mxu0 0.0
    %604 = vmatpush1.xpose.msra.mxu0 0.0
    %605 = vmatprep.subr.mxu0 0.0
    %606 = vmatpush1.xpose.msra.mxu0 0.0
    %607 = vmatprep.subr.mxu0 0.0
    %608 = vmatpush1.xpose.msra.mxu0 0.0
    %609 = vmatprep.subr.mxu0 0.0
    %610 = vmatpush1.xpose.msra.mxu0 0.0
    %611 = vmatprep.subr.mxu0 0.0
    %612 = vmatpush1.xpose.msra.mxu0 0.0
    %613 = vmatprep.subr.mxu0 0.0
    %614 = vmatpush1.xpose.msra.mxu0 0.0
    %615 = vmatprep.subr.mxu0 0.0
    %616 = vmatpush1.xpose.msra.mxu0 0.0
    %617 = vmatprep.subr.mxu0 0.0
    %618 = vmatpush1.xpose.msra.mxu0 0.0
    %619 = vmatprep.subr.mxu0 0.0
    %620 = vmatpush1.xpose.msra.mxu0 0.0
    %621 = vmatprep.subr.mxu0 0.0
    %622 = vmatpush1.xpose.msra.mxu0 0.0
    %623 = vmatprep.subr.mxu0 0.0
    %624 = vmatpush1.xpose.msra.mxu0 0.0
    %625 = vmatprep.subr.mxu0 0.0
    %626 = vmatpush1.xpose.msra.mxu0 0.0
    %627 = vmatprep.subr.mxu0 0.0
    %628 = vmatpush1.xpose.msra.mxu0 0.0
    %629 = vmatprep.subr.mxu0 0.0
    %630 = vmatpush1.xpose.msra.mxu0 0.0
    %631 = vmatprep.subr.mxu0 0.0
    %632 = vmatpush1.xpose.msra.mxu0 0.0
    %633 = vmatprep.subr.mxu0 0.0
    %634 = vmatpush1.xpose.msra.mxu0 0.0
    %635 = vmatprep.subr.mxu0 0.0
    %636 = vmatpush1.xpose.msra.mxu0 0.0
    %637 = vmatprep.subr.mxu0 0.0
    %638 = vmatpush1.xpose.msra.mxu0 0.0
    %639 = vmatprep.mubr.f32.mxu0 0.0
    %640 = vmatmul.mubr.f32.gmra.mrb[0].mxu0 %v571
    %v641 = vpop.f32.mrb[0].mxu0
    %v642 = vadd.f32 0.0, %v641
    %v643 = vpop.f32.mrb[0].mxu0
    %644 = vdwg.mxu0
    %v645 = vmul.f32 %v564, 0.17677669
    %v646 = vmul.f32 %v642, 0.17677669
    %v647 = vsel %vm310, %v645, -1e+30
    %v648 = vsel %vm310, %v646, -1e+30
    %v649 = vsel %vm155, %v647, -inf
    %650 = vmax.xlane.f32.xlu0 %v649
    %v651 = vpop.xlane.xlu0 %650
    %v652 = vsel %vm155, %v648, -inf
    %653 = vmax.xlane.f32.xlu0 %v652
    %v654 = vpop.xlane.xlu0 %653
    %v655 = vsub.f32 %v647, %v651
    %v656 = vsub.f32 %v648, %v654
    %v657 = vmul.f32 %v655, 1.442695
    %v658 = vpow.pop %v657
    %v659 = vmul.f32 %v656, 1.442695
    %v660 = vpow.pop %v659
    %v661 = vsel %vm155, %v658, 0.0
    %662 = vadd.xlane.f32.xlu0 %v661
    %v663 = vpop.xlane.xlu0 %662
    %v664 = vsel %vm155, %v660, 0.0
    %665 = vadd.xlane.f32.xlu0 %v664
    %v666 = vpop.xlane.xlu0 %665
    %v667 = vrcp.pop %v663
    %v668 = vrcp.pop %v666
    %v669 = vmul.f32 %v658, %v667
    %v670 = vmul.f32 %v660, %v668
    %671 = vrot.lane.b32.xlu0 %v139, 56
    %v672 = vpop.permute.xlu0 %671
    %v675 = vsel %vm155, %v669, 0
    %677 = vmatprep.subr.mxu0 0.0
    %678 = vmatpush1.msra.mxu0 %v672
    %679 = vmatprep.subr.mxu0 0.0
    %680 = vmatpush1.msra.mxu0 0.0
    %681 = vmatprep.subr.mxu0 0.0
    %682 = vmatpush1.msra.mxu0 0.0
    %683 = vmatprep.subr.mxu0 0.0
    %684 = vmatpush1.msra.mxu0 0.0
    %685 = vmatprep.subr.mxu0 0.0
    %686 = vmatpush1.msra.mxu0 0.0
    %687 = vmatprep.subr.mxu0 0.0
    %688 = vmatpush1.msra.mxu0 0.0
    %689 = vmatprep.subr.mxu0 0.0
    %690 = vmatpush1.msra.mxu0 0.0
    %691 = vmatprep.subr.mxu0 0.0
    %692 = vmatpush1.msra.mxu0 0.0
    %693 = vmatprep.subr.mxu0 0.0
    %694 = vmatpush1.msra.mxu0 0.0
    %695 = vmatprep.subr.mxu0 0.0
    %696 = vmatpush1.msra.mxu0 0.0
    %697 = vmatprep.subr.mxu0 0.0
    %698 = vmatpush1.msra.mxu0 0.0
    %699 = vmatprep.subr.mxu0 0.0
    %700 = vmatpush1.msra.mxu0 0.0
    %701 = vmatprep.subr.mxu0 0.0
    %702 = vmatpush1.msra.mxu0 0.0
    %703 = vmatprep.subr.mxu0 0.0
    %704 = vmatpush1.msra.mxu0 0.0
    %705 = vmatprep.subr.mxu0 0.0
    %706 = vmatpush1.msra.mxu0 0.0
    %707 = vmatprep.subr.mxu0 0.0
    %708 = vmatpush1.msra.mxu0 0.0
    %709 = vmatprep.subr.mxu0 0.0
    %710 = vmatpush1.msra.mxu0 0.0
    %711 = vmatprep.subr.mxu0 0.0
    %712 = vmatpush1.msra.mxu0 0.0
    %713 = vmatprep.subr.mxu0 0.0
    %714 = vmatpush1.msra.mxu0 0.0
    %715 = vmatprep.subr.mxu0 0.0
    %716 = vmatpush1.msra.mxu0 0.0
    %717 = vmatprep.subr.mxu0 0.0
    %718 = vmatpush1.msra.mxu0 0.0
    %719 = vmatprep.subr.mxu0 0.0
    %720 = vmatpush1.msra.mxu0 0.0
    %721 = vmatprep.subr.mxu0 0.0
    %722 = vmatpush1.msra.mxu0 0.0
    %723 = vmatprep.subr.mxu0 0.0
    %724 = vmatpush1.msra.mxu0 0.0
    %725 = vmatprep.subr.mxu0 0.0
    %726 = vmatpush1.msra.mxu0 0.0
    %727 = vmatprep.subr.mxu0 0.0
    %728 = vmatpush1.msra.mxu0 0.0
    %729 = vmatprep.subr.mxu0 0.0
    %730 = vmatpush1.msra.mxu0 0.0
    %731 = vmatprep.subr.mxu0 0.0
    %732 = vmatpush1.msra.mxu0 0.0
    %733 = vmatprep.subr.mxu0 0.0
    %734 = vmatpush1.msra.mxu0 0.0
    %735 = vmatprep.subr.mxu0 0.0
    %736 = vmatpush1.msra.mxu0 0.0
    %737 = vmatprep.subr.mxu0 0.0
    %738 = vmatpush1.msra.mxu0 0.0
    %739 = vmatprep.subr.mxu0 0.0
    %740 = vmatpush1.msra.mxu0 0.0
    %741 = vmatprep.mubr.f32.mxu0 0.0
    %742 = vmatmul.mubr.f32.gmra.mrb[0].mxu0 %v675
    %v743 = vpop.f32.mrb[0].mxu0
    %v744 = vadd.f32 0.0, %v743
    %v745 = vpop.f32.mrb[0].mxu0
    %746 = vdwg.mxu0
    %747 = vrot.lane.b32.xlu0 %v144, 56
    %v748 = vpop.permute.xlu0 %747
    %v751 = vsel %vm155, %v670, 0
    %753 = vmatprep.subr.mxu0 0.0
    %754 = vmatpush1.msra.mxu0 %v748
    %755 = vmatprep.subr.mxu0 0.0
    %756 = vmatpush1.msra.mxu0 0.0
    %757 = vmatprep.subr.mxu0 0.0
    %758 = vmatpush1.msra.mxu0 0.0
    %759 = vmatprep.subr.mxu0 0.0
    %760 = vmatpush1.msra.mxu0 0.0
    %761 = vmatprep.subr.mxu0 0.0
    %762 = vmatpush1.msra.mxu0 0.0
    %763 = vmatprep.subr.mxu0 0.0
    %764 = vmatpush1.msra.mxu0 0.0
    %765 = vmatprep.subr.mxu0 0.0
    %766 = vmatpush1.msra.mxu0 0.0
    %767 = vmatprep.subr.mxu0 0.0
    %768 = vmatpush1.msra.mxu0 0.0
    %769 = vmatprep.subr.mxu0 0.0
    %770 = vmatpush1.msra.mxu0 0.0
    %771 = vmatprep.subr.mxu0 0.0
    %772 = vmatpush1.msra.mxu0 0.0
    %773 = vmatprep.subr.mxu0 0.0
    %774 = vmatpush1.msra.mxu0 0.0
    %775 = vmatprep.subr.mxu0 0.0
    %776 = vmatpush1.msra.mxu0 0.0
    %777 = vmatprep.subr.mxu0 0.0
    %778 = vmatpush1.msra.mxu0 0.0
    %779 = vmatprep.subr.mxu0 0.0
    %780 = vmatpush1.msra.mxu0 0.0
    %781 = vmatprep.subr.mxu0 0.0
    %782 = vmatpush1.msra.mxu0 0.0
    %783 = vmatprep.subr.mxu0 0.0
    %784 = vmatpush1.msra.mxu0 0.0
    %785 = vmatprep.subr.mxu0 0.0
    %786 = vmatpush1.msra.mxu0 0.0
    %787 = vmatprep.subr.mxu0 0.0
    %788 = vmatpush1.msra.mxu0 0.0
    %789 = vmatprep.subr.mxu0 0.0
    %790 = vmatpush1.msra.mxu0 0.0
    %791 = vmatprep.subr.mxu0 0.0
    %792 = vmatpush1.msra.mxu0 0.0
    %793 = vmatprep.subr.mxu0 0.0
    %794 = vmatpush1.msra.mxu0 0.0
    %795 = vmatprep.subr.mxu0 0.0
    %796 = vmatpush1.msra.mxu0 0.0
    %797 = vmatprep.subr.mxu0 0.0
    %798 = vmatpush1.msra.mxu0 0.0
    %799 = vmatprep.subr.mxu0 0.0
    %800 = vmatpush1.msra.mxu0 0.0
    %801 = vmatprep.subr.mxu0 0.0
    %802 = vmatpush1.msra.mxu0 0.0
    %803 = vmatprep.subr.mxu0 0.0
    %804 = vmatpush1.msra.mxu0 0.0
    %805 = vmatprep.subr.mxu0 0.0
    %806 = vmatpush1.msra.mxu0 0.0
    %807 = vmatprep.subr.mxu0 0.0
    %808 = vmatpush1.msra.mxu0 0.0
    %809 = vmatprep.subr.mxu0 0.0
    %810 = vmatpush1.msra.mxu0 0.0
    %811 = vmatprep.subr.mxu0 0.0
    %812 = vmatpush1.msra.mxu0 0.0
    %813 = vmatprep.subr.mxu0 0.0
    %814 = vmatpush1.msra.mxu0 0.0
    %815 = vmatprep.subr.mxu0 0.0
    %816 = vmatpush1.msra.mxu0 0.0
    %817 = vmatprep.mubr.f32.mxu0 0.0
    %818 = vmatmul.mubr.f32.gmra.mrb[0].mxu0 %v751
    %v819 = vpop.f32.mrb[0].mxu0
    %v820 = vadd.f32 0.0, %v819
    %v821 = vpop.f32.mrb[0].mxu0
    %822 = vdwg.mxu0
    %825 = vrot.lane.b32.xlu0 %v744, 8
    %v826 = vpop.permute.xlu0 %825
    %827 = vrot.lane.b32.xlu0 %v820, 8
    %v828 = vpop.permute.xlu0 %827
    %vm831 = vcmask 130112
    %832 = vst.msk [vmem:[#allocation2] sm:$0xff] %vm831, %v826
    %833 = vst.msk [vmem:[#allocation2 + $0x8] sm:$0xff] %vm831, %v828
    %834 = vrot.lane.b32.xlu0 %v139, 112
    %v835 = vpop.permute.xlu0 %834
    %836 = vrot.lane.b32.xlu0 %v139, 80
    %v837 = vpop.permute.xlu0 %836
    %v838 = vsel %vm155, %v835, 0
    %v840 = vsel %vm155, %v837, 0
    %842 = vmatprep.subr.mxu0 0.0
    %843 = vmatpush1.xpose.msra.mxu0 %v840
    %844 = vmatprep.subr.mxu0 0.0
    %845 = vmatpush1.xpose.msra.mxu0 0.0
    %846 = vmatprep.subr.mxu0 0.0
    %847 = vmatpush1.xpose.msra.mxu0 0.0
    %848 = vmatprep.subr.mxu0 0.0
    %849 = vmatpush1.xpose.msra.mxu0 0.0
    %850 = vmatprep.subr.mxu0 0.0
    %851 = vmatpush1.xpose.msra.mxu0 0.0
    %852 = vmatprep.subr.mxu0 0.0
    %853 = vmatpush1.xpose.msra.mxu0 0.0
    %854 = vmatprep.subr.mxu0 0.0
    %855 = vmatpush1.xpose.msra.mxu0 0.0
    %856 = vmatprep.subr.mxu0 0.0
    %857 = vmatpush1.xpose.msra.mxu0 0.0
    %858 = vmatprep.subr.mxu0 0.0
    %859 = vmatpush1.xpose.msra.mxu0 0.0
    %860 = vmatprep.subr.mxu0 0.0
    %861 = vmatpush1.xpose.msra.mxu0 0.0
    %862 = vmatprep.subr.mxu0 0.0
    %863 = vmatpush1.xpose.msra.mxu0 0.0
    %864 = vmatprep.subr.mxu0 0.0
    %865 = vmatpush1.xpose.msra.mxu0 0.0
    %866 = vmatprep.subr.mxu0 0.0
    %867 = vmatpush1.xpose.msra.mxu0 0.0
    %868 = vmatprep.subr.mxu0 0.0
    %869 = vmatpush1.xpose.msra.mxu0 0.0
    %870 = vmatprep.subr.mxu0 0.0
    %871 = vmatpush1.xpose.msra.mxu0 0.0
    %872 = vmatprep.subr.mxu0 0.0
    %873 = vmatpush1.xpose.msra.mxu0 0.0
    %874 = vmatprep.subr.mxu0 0.0
    %875 = vmatpush1.xpose.msra.mxu0 0.0
    %876 = vmatprep.subr.mxu0 0.0
    %877 = vmatpush1.xpose.msra.mxu0 0.0
    %878 = vmatprep.subr.mxu0 0.0
    %879 = vmatpush1.xpose.msra.mxu0 0.0
    %880 = vmatprep.subr.mxu0 0.0
    %881 = vmatpush1.xpose.msra.mxu0 0.0
    %882 = vmatprep.subr.mxu0 0.0
    %883 = vmatpush1.xpose.msra.mxu0 0.0
    %884 = vmatprep.subr.mxu0 0.0
    %885 = vmatpush1.xpose.msra.mxu0 0.0
    %886 = vmatprep.subr.mxu0 0.0
    %887 = vmatpush1.xpose.msra.mxu0 0.0
    %888 = vmatprep.subr.mxu0 0.0
    %889 = vmatpush1.xpose.msra.mxu0 0.0
    %890 = vmatprep.subr.mxu0 0.0
    %891 = vmatpush1.xpose.msra.mxu0 0.0
    %892 = vmatprep.subr.mxu0 0.0
    %893 = vmatpush1.xpose.msra.mxu0 0.0
    %894 = vmatprep.subr.mxu0 0.0
    %895 = vmatpush1.xpose.msra.mxu0 0.0
    %896 = vmatprep.subr.mxu0 0.0
    %897 = vmatpush1.xpose.msra.mxu0 0.0
    %898 = vmatprep.subr.mxu0 0.0
    %899 = vmatpush1.xpose.msra.mxu0 0.0
    %900 = vmatprep.subr.mxu0 0.0
    %901 = vmatpush1.xpose.msra.mxu0 0.0
    %902 = vmatprep.subr.mxu0 0.0
    %903 = vmatpush1.xpose.msra.mxu0 0.0
    %904 = vmatprep.subr.mxu0 0.0
    %905 = vmatpush1.xpose.msra.mxu0 0.0
    %906 = vmatprep.mubr.f32.mxu0 0.0
    %907 = vmatmul.mubr.f32.gmra.mrb[0].mxu0 %v838
    %v908 = vpop.f32.mrb[0].mxu0
    %v909 = vadd.f32 0.0, %v908
    %v910 = vpop.f32.mrb[0].mxu0
    %911 = vdwg.mxu0
    %912 = vrot.lane.b32.xlu0 %v144, 112
    %v913 = vpop.permute.xlu0 %912
    %914 = vrot.lane.b32.xlu0 %v144, 80
    %v915 = vpop.permute.xlu0 %914
    %v916 = vsel %vm155, %v913, 0
    %v918 = vsel %vm155, %v915, 0
    %920 = vmatprep.subr.mxu0 0.0
    %921 = vmatpush1.xpose.msra.mxu0 %v918
    %922 = vmatprep.subr.mxu0 0.0
    %923 = vmatpush1.xpose.msra.mxu0 0.0
    %924 = vmatprep.subr.mxu0 0.0
    %925 = vmatpush1.xpose.msra.mxu0 0.0
    %926 = vmatprep.subr.mxu0 0.0
    %927 = vmatpush1.xpose.msra.mxu0 0.0
    %928 = vmatprep.subr.mxu0 0.0
    %929 = vmatpush1.xpose.msra.mxu0 0.0
    %930 = vmatprep.subr.mxu0 0.0
    %931 = vmatpush1.xpose.msra.mxu0 0.0
    %932 = vmatprep.subr.mxu0 0.0
    %933 = vmatpush1.xpose.msra.mxu0 0.0
    %934 = vmatprep.subr.mxu0 0.0
    %935 = vmatpush1.xpose.msra.mxu0 0.0
    %936 = vmatprep.subr.mxu0 0.0
    %937 = vmatpush1.xpose.msra.mxu0 0.0
    %938 = vmatprep.subr.mxu0 0.0
    %939 = vmatpush1.xpose.msra.mxu0 0.0
    %940 = vmatprep.subr.mxu0 0.0
    %941 = vmatpush1.xpose.msra.mxu0 0.0
    %942 = vmatprep.subr.mxu0 0.0
    %943 = vmatpush1.xpose.msra.mxu0 0.0
    %944 = vmatprep.subr.mxu0 0.0
    %945 = vmatpush1.xpose.msra.mxu0 0.0
    %946 = vmatprep.subr.mxu0 0.0
    %947 = vmatpush1.xpose.msra.mxu0 0.0
    %948 = vmatprep.subr.mxu0 0.0
    %949 = vmatpush1.xpose.msra.mxu0 0.0
    %950 = vmatprep.subr.mxu0 0.0
    %951 = vmatpush1.xpose.msra.mxu0 0.0
    %952 = vmatprep.subr.mxu0 0.0
    %953 = vmatpush1.xpose.msra.mxu0 0.0
    %954 = vmatprep.subr.mxu0 0.0
    %955 = vmatpush1.xpose.msra.mxu0 0.0
    %956 = vmatprep.subr.mxu0 0.0
    %957 = vmatpush1.xpose.msra.mxu0 0.0
    %958 = vmatprep.subr.mxu0 0.0
    %959 = vmatpush1.xpose.msra.mxu0 0.0
    %960 = vmatprep.subr.mxu0 0.0
    %961 = vmatpush1.xpose.msra.mxu0 0.0
    %962 = vmatprep.subr.mxu0 0.0
    %963 = vmatpush1.xpose.msra.mxu0 0.0
    %964 = vmatprep.subr.mxu0 0.0
    %965 = vmatpush1.xpose.msra.mxu0 0.0
    %966 = vmatprep.subr.mxu0 0.0
    %967 = vmatpush1.xpose.msra.mxu0 0.0
    %968 = vmatprep.subr.mxu0 0.0
    %969 = vmatpush1.xpose.msra.mxu0 0.0
    %970 = vmatprep.subr.mxu0 0.0
    %971 = vmatpush1.xpose.msra.mxu0 0.0
    %972 = vmatprep.subr.mxu0 0.0
    %973 = vmatpush1.xpose.msra.mxu0 0.0
    %974 = vmatprep.subr.mxu0 0.0
    %975 = vmatpush1.xpose.msra.mxu0 0.0
    %976 = vmatprep.subr.mxu0 0.0
    %977 = vmatpush1.xpose.msra.mxu0 0.0
    %978 = vmatprep.subr.mxu0 0.0
    %979 = vmatpush1.xpose.msra.mxu0 0.0
    %980 = vmatprep.subr.mxu0 0.0
    %981 = vmatpush1.xpose.msra.mxu0 0.0
    %982 = vmatprep.subr.mxu0 0.0
    %983 = vmatpush1.xpose.msra.mxu0 0.0
    %984 = vmatprep.mubr.f32.mxu0 0.0
    %985 = vmatmul.mubr.f32.gmra.mrb[0].mxu0 %v916
    %v986 = vpop.f32.mrb[0].mxu0
    %v987 = vadd.f32 0.0, %v986
    %v988 = vpop.f32.mrb[0].mxu0
    %989 = vdwg.mxu0
    %v990 = vmul.f32 %v909, 0.17677669
    %v991 = vmul.f32 %v987, 0.17677669
    %v992 = vsel %vm310, %v990, -1e+30
    %v993 = vsel %vm310, %v991, -1e+30
    %v994 = vsel %vm155, %v992, -inf
    %995 = vmax.xlane.f32.xlu0 %v994
    %v996 = vpop.xlane.xlu0 %995
    %v997 = vsel %vm155, %v993, -inf
    %998 = vmax.xlane.f32.xlu0 %v997
    %v999 = vpop.xlane.xlu0 %998
    %v1000 = vsub.f32 %v992, %v996
    %v1001 = vsub.f32 %v993, %v999
    %v1002 = vmul.f32 %v1000, 1.442695
    %v1003 = vpow.pop %v1002
    %v1004 = vmul.f32 %v1001, 1.442695
    %v1005 = vpow.pop %v1004
    %v1006 = vsel %vm155, %v1003, 0.0
    %1007 = vadd.xlane.f32.xlu0 %v1006
    %v1008 = vpop.xlane.xlu0 %1007
    %v1009 = vsel %vm155, %v1005, 0.0
    %1010 = vadd.xlane.f32.xlu0 %v1009
    %v1011 = vpop.xlane.xlu0 %1010
    %v1012 = vrcp.pop %v1008
    %v1013 = vrcp.pop %v1011
    %v1014 = vmul.f32 %v1003, %v1012
    %v1015 = vmul.f32 %v1005, %v1013
    %1016 = vrot.lane.b32.xlu0 %v139, 48
    %v1017 = vpop.permute.xlu0 %1016
    %v1020 = vsel %vm155, %v1014, 0
    %1022 = vmatprep.subr.mxu0 0.0
    %1023 = vmatpush1.msra.mxu0 %v1017
    %1024 = vmatprep.subr.mxu0 0.0
    %1025 = vmatpush1.msra.mxu0 0.0
    %1026 = vmatprep.subr.mxu0 0.0
    %1027 = vmatpush1.msra.mxu0 0.0
    %1028 = vmatprep.subr.mxu0 0.0
    %1029 = vmatpush1.msra.mxu0 0.0
    %1030 = vmatprep.subr.mxu0 0.0
    %1031 = vmatpush1.msra.mxu0 0.0
    %1032 = vmatprep.subr.mxu0 0.0
    %1033 = vmatpush1.msra.mxu0 0.0
    %1034 = vmatprep.subr.mxu0 0.0
    %1035 = vmatpush1.msra.mxu0 0.0
    %1036 = vmatprep.subr.mxu0 0.0
    %1037 = vmatpush1.msra.mxu0 0.0
    %1038 = vmatprep.subr.mxu0 0.0
    %1039 = vmatpush1.msra.mxu0 0.0
    %1040 = vmatprep.subr.mxu0 0.0
    %1041 = vmatpush1.msra.mxu0 0.0
    %1042 = vmatprep.subr.mxu0 0.0
    %1043 = vmatpush1.msra.mxu0 0.0
    %1044 = vmatprep.subr.mxu0 0.0
    %1045 = vmatpush1.msra.mxu0 0.0
    %1046 = vmatprep.subr.mxu0 0.0
    %1047 = vmatpush1.msra.mxu0 0.0
    %1048 = vmatprep.subr.mxu0 0.0
    %1049 = vmatpush1.msra.mxu0 0.0
    %1050 = vmatprep.subr.mxu0 0.0
    %1051 = vmatpush1.msra.mxu0 0.0
    %1052 = vmatprep.subr.mxu0 0.0
    %1053 = vmatpush1.msra.mxu0 0.0
    %1054 = vmatprep.subr.mxu0 0.0
    %1055 = vmatpush1.msra.mxu0 0.0
    %1056 = vmatprep.subr.mxu0 0.0
    %1057 = vmatpush1.msra.mxu0 0.0
    %1058 = vmatprep.subr.mxu0 0.0
    %1059 = vmatpush1.msra.mxu0 0.0
    %1060 = vmatprep.subr.mxu0 0.0
    %1061 = vmatpush1.msra.mxu0 0.0
    %1062 = vmatprep.subr.mxu0 0.0
    %1063 = vmatpush1.msra.mxu0 0.0
    %1064 = vmatprep.subr.mxu0 0.0
    %1065 = vmatpush1.msra.mxu0 0.0
    %1066 = vmatprep.subr.mxu0 0.0
    %1067 = vmatpush1.msra.mxu0 0.0
    %1068 = vmatprep.subr.mxu0 0.0
    %1069 = vmatpush1.msra.mxu0 0.0
    %1070 = vmatprep.subr.mxu0 0.0
    %1071 = vmatpush1.msra.mxu0 0.0
    %1072 = vmatprep.subr.mxu0 0.0
    %1073 = vmatpush1.msra.mxu0 0.0
    %1074 = vmatprep.subr.mxu0 0.0
    %1075 = vmatpush1.msra.mxu0 0.0
    %1076 = vmatprep.subr.mxu0 0.0
    %1077 = vmatpush1.msra.mxu0 0.0
    %1078 = vmatprep.subr.mxu0 0.0
    %1079 = vmatpush1.msra.mxu0 0.0
    %1080 = vmatprep.subr.mxu0 0.0
    %1081 = vmatpush1.msra.mxu0 0.0
    %1082 = vmatprep.subr.mxu0 0.0
    %1083 = vmatpush1.msra.mxu0 0.0
    %1084 = vmatprep.subr.mxu0 0.0
    %1085 = vmatpush1.msra.mxu0 0.0
    %1086 = vmatprep.mubr.f32.mxu0 0.0
    %1087 = vmatmul.mubr.f32.gmra.mrb[0].mxu0 %v1020
    %v1088 = vpop.f32.mrb[0].mxu0
    %v1089 = vadd.f32 0.0, %v1088
    %v1090 = vpop.f32.mrb[0].mxu0
    %1091 = vdwg.mxu0
    %1092 = vrot.lane.b32.xlu0 %v144, 48
    %v1093 = vpop.permute.xlu0 %1092
    %v1096 = vsel %vm155, %v1015, 0
    %1098 = vmatprep.subr.mxu0 0.0
    %1099 = vmatpush1.msra.mxu0 %v1093
    %1100 = vmatprep.subr.mxu0 0.0
    %1101 = vmatpush1.msra.mxu0 0.0
    %1102 = vmatprep.subr.mxu0 0.0
    %1103 = vmatpush1.msra.mxu0 0.0
    %1104 = vmatprep.subr.mxu0 0.0
    %1105 = vmatpush1.msra.mxu0 0.0
    %1106 = vmatprep.subr.mxu0 0.0
    %1107 = vmatpush1.msra.mxu0 0.0
    %1108 = vmatprep.subr.mxu0 0.0
    %1109 = vmatpush1.msra.mxu0 0.0
    %1110 = vmatprep.subr.mxu0 0.0
    %1111 = vmatpush1.msra.mxu0 0.0
    %1112 = vmatprep.subr.mxu0 0.0
    %1113 = vmatpush1.msra.mxu0 0.0
    %1114 = vmatprep.subr.mxu0 0.0
    %1115 = vmatpush1.msra.mxu0 0.0
    %1116 = vmatprep.subr.mxu0 0.0
    %1117 = vmatpush1.msra.mxu0 0.0
    %1118 = vmatprep.subr.mxu0 0.0
    %1119 = vmatpush1.msra.mxu0 0.0
    %1120 = vmatprep.subr.mxu0 0.0
    %1121 = vmatpush1.msra.mxu0 0.0
    %1122 = vmatprep.subr.mxu0 0.0
    %1123 = vmatpush1.msra.mxu0 0.0
    %1124 = vmatprep.subr.mxu0 0.0
    %1125 = vmatpush1.msra.mxu0 0.0
    %1126 = vmatprep.subr.mxu0 0.0
    %1127 = vmatpush1.msra.mxu0 0.0
    %1128 = vmatprep.subr.mxu0 0.0
    %1129 = vmatpush1.msra.mxu0 0.0
    %1130 = vmatprep.subr.mxu0 0.0
    %1131 = vmatpush1.msra.mxu0 0.0
    %1132 = vmatprep.subr.mxu0 0.0
    %1133 = vmatpush1.msra.mxu0 0.0
    %1134 = vmatprep.subr.mxu0 0.0
    %1135 = vmatpush1.msra.mxu0 0.0
    %1136 = vmatprep.subr.mxu0 0.0
    %1137 = vmatpush1.msra.mxu0 0.0
    %1138 = vmatprep.subr.mxu0 0.0
    %1139 = vmatpush1.msra.mxu0 0.0
    %1140 = vmatprep.subr.mxu0 0.0
    %1141 = vmatpush1.msra.mxu0 0.0
    %1142 = vmatprep.subr.mxu0 0.0
    %1143 = vmatpush1.msra.mxu0 0.0
    %1144 = vmatprep.subr.mxu0 0.0
    %1145 = vmatpush1.msra.mxu0 0.0
    %1146 = vmatprep.subr.mxu0 0.0
    %1147 = vmatpush1.msra.mxu0 0.0
    %1148 = vmatprep.subr.mxu0 0.0
    %1149 = vmatpush1.msra.mxu0 0.0
    %1150 = vmatprep.subr.mxu0 0.0
    %1151 = vmatpush1.msra.mxu0 0.0
    %1152 = vmatprep.subr.mxu0 0.0
    %1153 = vmatpush1.msra.mxu0 0.0
    %1154 = vmatprep.subr.mxu0 0.0
    %1155 = vmatpush1.msra.mxu0 0.0
    %1156 = vmatprep.subr.mxu0 0.0
    %1157 = vmatpush1.msra.mxu0 0.0
    %1158 = vmatprep.subr.mxu0 0.0
    %1159 = vmatpush1.msra.mxu0 0.0
    %1160 = vmatprep.subr.mxu0 0.0
    %1161 = vmatpush1.msra.mxu0 0.0
    %1162 = vmatprep.mubr.f32.mxu0 0.0
    %1163 = vmatmul.mubr.f32.gmra.mrb[0].mxu0 %v1096
    %v1164 = vpop.f32.mrb[0].mxu0
    %v1165 = vadd.f32 0.0, %v1164
    %v1166 = vpop.f32.mrb[0].mxu0
    %1167 = vdwg.mxu0
    %1170 = vrot.lane.b32.xlu0 %v1089, 16
    %v1171 = vpop.permute.xlu0 %1170
    %1172 = vrot.lane.b32.xlu0 %v1165, 16
    %v1173 = vpop.permute.xlu0 %1172
    %vm1176 = vcmask 195712
    %1177 = vst.msk [vmem:[#allocation2] sm:$0xff] %vm1176, %v1171
    %1178 = vst.msk [vmem:[#allocation2 + $0x8] sm:$0xff] %vm1176, %v1173
    %1179 = vrot.lane.b32.xlu0 %v139, 104
    %v1180 = vpop.permute.xlu0 %1179
    %1181 = vrot.lane.b32.xlu0 %v139, 72
    %v1182 = vpop.permute.xlu0 %1181
    %v1183 = vsel %vm155, %v1180, 0
    %v1185 = vsel %vm155, %v1182, 0
    %1187 = vmatprep.subr.mxu0 0.0
    %1188 = vmatpush1.xpose.msra.mxu0 %v1185
    %1189 = vmatprep.subr.mxu0 0.0
    %1190 = vmatpush1.xpose.msra.mxu0 0.0
    %1191 = vmatprep.subr.mxu0 0.0
    %1192 = vmatpush1.xpose.msra.mxu0 0.0
    %1193 = vmatprep.subr.mxu0 0.0
    %1194 = vmatpush1.xpose.msra.mxu0 0.0
    %1195 = vmatprep.subr.mxu0 0.0
    %1196 = vmatpush1.xpose.msra.mxu0 0.0
    %1197 = vmatprep.subr.mxu0 0.0
    %1198 = vmatpush1.xpose.msra.mxu0 0.0
    %1199 = vmatprep.subr.mxu0 0.0
    %1200 = vmatpush1.xpose.msra.mxu0 0.0
    %1201 = vmatprep.subr.mxu0 0.0
    %1202 = vmatpush1.xpose.msra.mxu0 0.0
    %1203 = vmatprep.subr.mxu0 0.0
    %1204 = vmatpush1.xpose.msra.mxu0 0.0
    %1205 = vmatprep.subr.mxu0 0.0
    %1206 = vmatpush1.xpose.msra.mxu0 0.0
    %1207 = vmatprep.subr.mxu0 0.0
    %1208 = vmatpush1.xpose.msra.mxu0 0.0
    %1209 = vmatprep.subr.mxu0 0.0
    %1210 = vmatpush1.xpose.msra.mxu0 0.0
    %1211 = vmatprep.subr.mxu0 0.0
    %1212 = vmatpush1.xpose.msra.mxu0 0.0
    %1213 = vmatprep.subr.mxu0 0.0
    %1214 = vmatpush1.xpose.msra.mxu0 0.0
    %1215 = vmatprep.subr.mxu0 0.0
    %1216 = vmatpush1.xpose.msra.mxu0 0.0
    %1217 = vmatprep.subr.mxu0 0.0
    %1218 = vmatpush1.xpose.msra.mxu0 0.0
    %1219 = vmatprep.subr.mxu0 0.0
    %1220 = vmatpush1.xpose.msra.mxu0 0.0
    %1221 = vmatprep.subr.mxu0 0.0
    %1222 = vmatpush1.xpose.msra.mxu0 0.0
    %1223 = vmatprep.subr.mxu0 0.0
    %1224 = vmatpush1.xpose.msra.mxu0 0.0
    %1225 = vmatprep.subr.mxu0 0.0
    %1226 = vmatpush1.xpose.msra.mxu0 0.0
    %1227 = vmatprep.subr.mxu0 0.0
    %1228 = vmatpush1.xpose.msra.mxu0 0.0
    %1229 = vmatprep.subr.mxu0 0.0
    %1230 = vmatpush1.xpose.msra.mxu0 0.0
    %1231 = vmatprep.subr.mxu0 0.0
    %1232 = vmatpush1.xpose.msra.mxu0 0.0
    %1233 = vmatprep.subr.mxu0 0.0
    %1234 = vmatpush1.xpose.msra.mxu0 0.0
    %1235 = vmatprep.subr.mxu0 0.0
    %1236 = vmatpush1.xpose.msra.mxu0 0.0
    %1237 = vmatprep.subr.mxu0 0.0
    %1238 = vmatpush1.xpose.msra.mxu0 0.0
    %1239 = vmatprep.subr.mxu0 0.0
    %1240 = vmatpush1.xpose.msra.mxu0 0.0
    %1241 = vmatprep.subr.mxu0 0.0
    %1242 = vmatpush1.xpose.msra.mxu0 0.0
    %1243 = vmatprep.subr.mxu0 0.0
    %1244 = vmatpush1.xpose.msra.mxu0 0.0
    %1245 = vmatprep.subr.mxu0 0.0
    %1246 = vmatpush1.xpose.msra.mxu0 0.0
    %1247 = vmatprep.subr.mxu0 0.0
    %1248 = vmatpush1.xpose.msra.mxu0 0.0
    %1249 = vmatprep.subr.mxu0 0.0
    %1250 = vmatpush1.xpose.msra.mxu0 0.0
    %1251 = vmatprep.mubr.f32.mxu0 0.0
    %1252 = vmatmul.mubr.f32.gmra.mrb[0].mxu0 %v1183
    %v1253 = vpop.f32.mrb[0].mxu0
    %v1254 = vadd.f32 0.0, %v1253
    %v1255 = vpop.f32.mrb[0].mxu0
    %1256 = vdwg.mxu0
    %1257 = vrot.lane.b32.xlu0 %v144, 104
    %v1258 = vpop.permute.xlu0 %1257
    %1259 = vrot.lane.b32.xlu0 %v144, 72
    %v1260 = vpop.permute.xlu0 %1259
    %v1261 = vsel %vm155, %v1258, 0
    %v1263 = vsel %vm155, %v1260, 0
    %1265 = vmatprep.subr.mxu0 0.0
    %1266 = vmatpush1.xpose.msra.mxu0 %v1263
    %1267 = vmatprep.subr.mxu0 0.0
    %1268 = vmatpush1.xpose.msra.mxu0 0.0
    %1269 = vmatprep.subr.mxu0 0.0
    %1270 = vmatpush1.xpose.msra.mxu0 0.0
    %1271 = vmatprep.subr.mxu0 0.0
    %1272 = vmatpush1.xpose.msra.mxu0 0.0
    %1273 = vmatprep.subr.mxu0 0.0
    %1274 = vmatpush1.xpose.msra.mxu0 0.0
    %1275 = vmatprep.subr.mxu0 0.0
    %1276 = vmatpush1.xpose.msra.mxu0 0.0
    %1277 = vmatprep.subr.mxu0 0.0
    %1278 = vmatpush1.xpose.msra.mxu0 0.0
    %1279 = vmatprep.subr.mxu0 0.0
    %1280 = vmatpush1.xpose.msra.mxu0 0.0
    %1281 = vmatprep.subr.mxu0 0.0
    %1282 = vmatpush1.xpose.msra.mxu0 0.0
    %1283 = vmatprep.subr.mxu0 0.0
    %1284 = vmatpush1.xpose.msra.mxu0 0.0
    %1285 = vmatprep.subr.mxu0 0.0
    %1286 = vmatpush1.xpose.msra.mxu0 0.0
    %1287 = vmatprep.subr.mxu0 0.0
    %1288 = vmatpush1.xpose.msra.mxu0 0.0
    %1289 = vmatprep.subr.mxu0 0.0
    %1290 = vmatpush1.xpose.msra.mxu0 0.0
    %1291 = vmatprep.subr.mxu0 0.0
    %1292 = vmatpush1.xpose.msra.mxu0 0.0
    %1293 = vmatprep.subr.mxu0 0.0
    %1294 = vmatpush1.xpose.msra.mxu0 0.0
    %1295 = vmatprep.subr.mxu0 0.0
    %1296 = vmatpush1.xpose.msra.mxu0 0.0
    %1297 = vmatprep.subr.mxu0 0.0
    %1298 = vmatpush1.xpose.msra.mxu0 0.0
    %1299 = vmatprep.subr.mxu0 0.0
    %1300 = vmatpush1.xpose.msra.mxu0 0.0
    %1301 = vmatprep.subr.mxu0 0.0
    %1302 = vmatpush1.xpose.msra.mxu0 0.0
    %1303 = vmatprep.subr.mxu0 0.0
    %1304 = vmatpush1.xpose.msra.mxu0 0.0
    %1305 = vmatprep.subr.mxu0 0.0
    %1306 = vmatpush1.xpose.msra.mxu0 0.0
    %1307 = vmatprep.subr.mxu0 0.0
    %1308 = vmatpush1.xpose.msra.mxu0 0.0
    %1309 = vmatprep.subr.mxu0 0.0
    %1310 = vmatpush1.xpose.msra.mxu0 0.0
    %1311 = vmatprep.subr.mxu0 0.0
    %1312 = vmatpush1.xpose.msra.mxu0 0.0
    %1313 = vmatprep.subr.mxu0 0.0
    %1314 = vmatpush1.xpose.msra.mxu0 0.0
    %1315 = vmatprep.subr.mxu0 0.0
    %1316 = vmatpush1.xpose.msra.mxu0 0.0
    %1317 = vmatprep.subr.mxu0 0.0
    %1318 = vmatpush1.xpose.msra.mxu0 0.0
    %1319 = vmatprep.subr.mxu0 0.0
    %1320 = vmatpush1.xpose.msra.mxu0 0.0
    %1321 = vmatprep.subr.mxu0 0.0
    %1322 = vmatpush1.xpose.msra.mxu0 0.0
    %1323 = vmatprep.subr.mxu0 0.0
    %1324 = vmatpush1.xpose.msra.mxu0 0.0
    %1325 = vmatprep.subr.mxu0 0.0
    %1326 = vmatpush1.xpose.msra.mxu0 0.0
    %1327 = vmatprep.subr.mxu0 0.0
    %1328 = vmatpush1.xpose.msra.mxu0 0.0
    %1329 = vmatprep.mubr.f32.mxu0 0.0
    %1330 = vmatmul.mubr.f32.gmra.mrb[0].mxu0 %v1261
    %v1331 = vpop.f32.mrb[0].mxu0
    %v1332 = vadd.f32 0.0, %v1331
    %v1333 = vpop.f32.mrb[0].mxu0
    %1334 = vdwg.mxu0
    %v1335 = vmul.f32 %v1254, 0.17677669
    %v1336 = vmul.f32 %v1332, 0.17677669
    %v1337 = vsel %vm310, %v1335, -1e+30
    %v1338 = vsel %vm310, %v1336, -1e+30
    %v1339 = vsel %vm155, %v1337, -inf
    %1340 = vmax.xlane.f32.xlu0 %v1339
    %v1341 = vpop.xlane.xlu0 %1340
    %v1342 = vsel %vm155, %v1338, -inf
    %1343 = vmax.xlane.f32.xlu0 %v1342
    %v1344 = vpop.xlane.xlu0 %1343
    %v1345 = vsub.f32 %v1337, %v1341
    %v1346 = vsub.f32 %v1338, %v1344
    %v1347 = vmul.f32 %v1345, 1.442695
    %v1348 = vpow.pop %v1347
    %v1349 = vmul.f32 %v1346, 1.442695
    %v1350 = vpow.pop %v1349
    %v1351 = vsel %vm155, %v1348, 0.0
    %1352 = vadd.xlane.f32.xlu0 %v1351
    %v1353 = vpop.xlane.xlu0 %1352
    %v1354 = vsel %vm155, %v1350, 0.0
    %1355 = vadd.xlane.f32.xlu0 %v1354
    %v1356 = vpop.xlane.xlu0 %1355
    %v1357 = vrcp.pop %v1353
    %v1358 = vrcp.pop %v1356
    %v1359 = vmul.f32 %v1348, %v1357
    %v1360 = vmul.f32 %v1350, %v1358
    %1361 = vrot.lane.b32.xlu0 %v139, 40
    %v1362 = vpop.permute.xlu0 %1361
    %v1365 = vsel %vm155, %v1359, 0
    %1367 = vmatprep.subr.mxu0 0.0
    %1368 = vmatpush1.msra.mxu0 %v1362
    %1369 = vmatprep.subr.mxu0 0.0
    %1370 = vmatpush1.msra.mxu0 0.0
    %1371 = vmatprep.subr.mxu0 0.0
    %1372 = vmatpush1.msra.mxu0 0.0
    %1373 = vmatprep.subr.mxu0 0.0
    %1374 = vmatpush1.msra.mxu0 0.0
    %1375 = vmatprep.subr.mxu0 0.0
    %1376 = vmatpush1.msra.mxu0 0.0
    %1377 = vmatprep.subr.mxu0 0.0
    %1378 = vmatpush1.msra.mxu0 0.0
    %1379 = vmatprep.subr.mxu0 0.0
    %1380 = vmatpush1.msra.mxu0 0.0
    %1381 = vmatprep.subr.mxu0 0.0
    %1382 = vmatpush1.msra.mxu0 0.0
    %1383 = vmatprep.subr.mxu0 0.0
    %1384 = vmatpush1.msra.mxu0 0.0
    %1385 = vmatprep.subr.mxu0 0.0
    %1386 = vmatpush1.msra.mxu0 0.0
    %1387 = vmatprep.subr.mxu0 0.0
    %1388 = vmatpush1.msra.mxu0 0.0
    %1389 = vmatprep.subr.mxu0 0.0
    %1390 = vmatpush1.msra.mxu0 0.0
    %1391 = vmatprep.subr.mxu0 0.0
    %1392 = vmatpush1.msra.mxu0 0.0
    %1393 = vmatprep.subr.mxu0 0.0
    %1394 = vmatpush1.msra.mxu0 0.0
    %1395 = vmatprep.subr.mxu0 0.0
    %1396 = vmatpush1.msra.mxu0 0.0
    %1397 = vmatprep.subr.mxu0 0.0
    %1398 = vmatpush1.msra.mxu0 0.0
    %1399 = vmatprep.subr.mxu0 0.0
    %1400 = vmatpush1.msra.mxu0 0.0
    %1401 = vmatprep.subr.mxu0 0.0
    %1402 = vmatpush1.msra.mxu0 0.0
    %1403 = vmatprep.subr.mxu0 0.0
    %1404 = vmatpush1.msra.mxu0 0.0
    %1405 = vmatprep.subr.mxu0 0.0
    %1406 = vmatpush1.msra.mxu0 0.0
    %1407 = vmatprep.subr.mxu0 0.0
    %1408 = vmatpush1.msra.mxu0 0.0
    %1409 = vmatprep.subr.mxu0 0.0
    %1410 = vmatpush1.msra.mxu0 0.0
    %1411 = vmatprep.subr.mxu0 0.0
    %1412 = vmatpush1.msra.mxu0 0.0
    %1413 = vmatprep.subr.mxu0 0.0
    %1414 = vmatpush1.msra.mxu0 0.0
    %1415 = vmatprep.subr.mxu0 0.0
    %1416 = vmatpush1.msra.mxu0 0.0
    %1417 = vmatprep.subr.mxu0 0.0
    %1418 = vmatpush1.msra.mxu0 0.0
    %1419 = vmatprep.subr.mxu0 0.0
    %1420 = vmatpush1.msra.mxu0 0.0
    %1421 = vmatprep.subr.mxu0 0.0
    %1422 = vmatpush1.msra.mxu0 0.0
    %1423 = vmatprep.subr.mxu0 0.0
    %1424 = vmatpush1.msra.mxu0 0.0
    %1425 = vmatprep.subr.mxu0 0.0
    %1426 = vmatpush1.msra.mxu0 0.0
    %1427 = vmatprep.subr.mxu0 0.0
    %1428 = vmatpush1.msra.mxu0 0.0
    %1429 = vmatprep.subr.mxu0 0.0
    %1430 = vmatpush1.msra.mxu0 0.0
    %1431 = vmatprep.mubr.f32.mxu0 0.0
    %1432 = vmatmul.mubr.f32.gmra.mrb[0].mxu0 %v1365
    %v1433 = vpop.f32.mrb[0].mxu0
    %v1434 = vadd.f32 0.0, %v1433
    %v1435 = vpop.f32.mrb[0].mxu0
    %1436 = vdwg.mxu0
    %1437 = vrot.lane.b32.xlu0 %v144, 40
    %v1438 = vpop.permute.xlu0 %1437
    %v1441 = vsel %vm155, %v1360, 0
    %1443 = vmatprep.subr.mxu0 0.0
    %1444 = vmatpush1.msra.mxu0 %v1438
    %1445 = vmatprep.subr.mxu0 0.0
    %1446 = vmatpush1.msra.mxu0 0.0
    %1447 = vmatprep.subr.mxu0 0.0
    %1448 = vmatpush1.msra.mxu0 0.0
    %1449 = vmatprep.subr.mxu0 0.0
    %1450 = vmatpush1.msra.mxu0 0.0
    %1451 = vmatprep.subr.mxu0 0.0
    %1452 = vmatpush1.msra.mxu0 0.0
    %1453 = vmatprep.subr.mxu0 0.0
    %1454 = vmatpush1.msra.mxu0 0.0
    %1455 = vmatprep.subr.mxu0 0.0
    %1456 = vmatpush1.msra.mxu0 0.0
    %1457 = vmatprep.subr.mxu0 0.0
    %1458 = vmatpush1.msra.mxu0 0.0
    %1459 = vmatprep.subr.mxu0 0.0
    %1460 = vmatpush1.msra.mxu0 0.0
    %1461 = vmatprep.subr.mxu0 0.0
    %1462 = vmatpush1.msra.mxu0 0.0
    %1463 = vmatprep.subr.mxu0 0.0
    %1464 = vmatpush1.msra.mxu0 0.0
    %1465 = vmatprep.subr.mxu0 0.0
    %1466 = vmatpush1.msra.mxu0 0.0
    %1467 = vmatprep.subr.mxu0 0.0
    %1468 = vmatpush1.msra.mxu0 0.0
    %1469 = vmatprep.subr.mxu0 0.0
    %1470 = vmatpush1.msra.mxu0 0.0
    %1471 = vmatprep.subr.mxu0 0.0
    %1472 = vmatpush1.msra.mxu0 0.0
    %1473 = vmatprep.subr.mxu0 0.0
    %1474 = vmatpush1.msra.mxu0 0.0
    %1475 = vmatprep.subr.mxu0 0.0
    %1476 = vmatpush1.msra.mxu0 0.0
    %1477 = vmatprep.subr.mxu0 0.0
    %1478 = vmatpush1.msra.mxu0 0.0
    %1479 = vmatprep.subr.mxu0 0.0
    %1480 = vmatpush1.msra.mxu0 0.0
    %1481 = vmatprep.subr.mxu0 0.0
    %1482 = vmatpush1.msra.mxu0 0.0
    %1483 = vmatprep.subr.mxu0 0.0
    %1484 = vmatpush1.msra.mxu0 0.0
    %1485 = vmatprep.subr.mxu0 0.0
    %1486 = vmatpush1.msra.mxu0 0.0
    %1487 = vmatprep.subr.mxu0 0.0
    %1488 = vmatpush1.msra.mxu0 0.0
    %1489 = vmatprep.subr.mxu0 0.0
    %1490 = vmatpush1.msra.mxu0 0.0
    %1491 = vmatprep.subr.mxu0 0.0
    %1492 = vmatpush1.msra.mxu0 0.0
    %1493 = vmatprep.subr.mxu0 0.0
    %1494 = vmatpush1.msra.mxu0 0.0
    %1495 = vmatprep.subr.mxu0 0.0
    %1496 = vmatpush1.msra.mxu0 0.0
    %1497 = vmatprep.subr.mxu0 0.0
    %1498 = vmatpush1.msra.mxu0 0.0
    %1499 = vmatprep.subr.mxu0 0.0
    %1500 = vmatpush1.msra.mxu0 0.0
    %1501 = vmatprep.subr.mxu0 0.0
    %1502 = vmatpush1.msra.mxu0 0.0
    %1503 = vmatprep.subr.mxu0 0.0
    %1504 = vmatpush1.msra.mxu0 0.0
    %1505 = vmatprep.subr.mxu0 0.0
    %1506 = vmatpush1.msra.mxu0 0.0
    %1507 = vmatprep.mubr.f32.mxu0 0.0
    %1508 = vmatmul.mubr.f32.gmra.mrb[0].mxu0 %v1441
    %v1509 = vpop.f32.mrb[0].mxu0
    %v1510 = vadd.f32 0.0, %v1509
    %v1511 = vpop.f32.mrb[0].mxu0
    %1512 = vdwg.mxu0
    %1515 = vrot.lane.b32.xlu0 %v1434, 24
    %v1516 = vpop.permute.xlu0 %1515
    %1517 = vrot.lane.b32.xlu0 %v1510, 24
    %v1518 = vpop.permute.xlu0 %1517
    %vm1521 = vcmask 261312
    %1522 = vst.msk [vmem:[#allocation2] sm:$0xff] %vm1521, %v1516
    %1523 = vst.msk [vmem:[#allocation2 + $0x8] sm:$0xff] %vm1521, %v1518
    %v1524 = vld [vmem:[#allocation2] sm:$0xff]
    %v1525 = vld [vmem:[#allocation2 + $0x8] sm:$0xff]
    %v1526 = vld [vmem:[#allocation8] sm:$0xff]
    %v1527 = vld [vmem:[#allocation8 + $0x8] sm:$0xff]
    %v1528 = vld [vmem:[#allocation8 + $0x10] sm:$0xff]
    %v1529 = vld [vmem:[#allocation8 + $0x18] sm:$0xff]
    %v1530 = vld [vmem:[%s3] sm:$0x1]
    %v1532 = vlaneseq
    %v1533 = vshrl.u32 %v1532, 7
    %v1534 = vsub.s32 0, %v1533
    %v1535 = vrot.slane %v1530, %v1534
    %v1538 = vsel %vm65, %v1524, 0
    %v1541 = vsel %vm65, %v1525, 0
    %1543 = vmatprep.subr.mxu0 0.0
    %1544 = vmatpush1.msra.mxu0 %v1526
    %1545 = vmatprep.subr.mxu0 0.0
    %1546 = vmatpush1.msra.mxu0 %v1527
    %1547 = vmatprep.subr.mxu0 0.0
    %1548 = vmatpush1.msra.mxu0 %v1528
    %1549 = vmatprep.subr.mxu0 0.0
    %1550 = vmatpush1.msra.mxu0 %v1529
    %1551 = vmatprep.subr.mxu0 0.0
    %1552 = vmatpush1.msra.mxu0 0.0
    %1553 = vmatprep.subr.mxu0 0.0
    %1554 = vmatpush1.msra.mxu0 0.0
    %1555 = vmatprep.subr.mxu0 0.0
    %1556 = vmatpush1.msra.mxu0 0.0
    %1557 = vmatprep.subr.mxu0 0.0
    %1558 = vmatpush1.msra.mxu0 0.0
    %1559 = vmatprep.subr.mxu0 0.0
    %1560 = vmatpush1.msra.mxu0 0.0
    %1561 = vmatprep.subr.mxu0 0.0
    %1562 = vmatpush1.msra.mxu0 0.0
    %1563 = vmatprep.subr.mxu0 0.0
    %1564 = vmatpush1.msra.mxu0 0.0
    %1565 = vmatprep.subr.mxu0 0.0
    %1566 = vmatpush1.msra.mxu0 0.0
    %1567 = vmatprep.subr.mxu0 0.0
    %1568 = vmatpush1.msra.mxu0 0.0
    %1569 = vmatprep.subr.mxu0 0.0
    %1570 = vmatpush1.msra.mxu0 0.0
    %1571 = vmatprep.subr.mxu0 0.0
    %1572 = vmatpush1.msra.mxu0 0.0
    %1573 = vmatprep.subr.mxu0 0.0
    %1574 = vmatpush1.msra.mxu0 0.0
    %1575 = vmatprep.subr.mxu0 0.0
    %1576 = vmatpush1.msra.mxu0 0.0
    %1577 = vmatprep.subr.mxu0 0.0
    %1578 = vmatpush1.msra.mxu0 0.0
    %1579 = vmatprep.subr.mxu0 0.0
    %1580 = vmatpush1.msra.mxu0 0.0
    %1581 = vmatprep.subr.mxu0 0.0
    %1582 = vmatpush1.msra.mxu0 0.0
    %1583 = vmatprep.subr.mxu0 0.0
    %1584 = vmatpush1.msra.mxu0 0.0
    %1585 = vmatprep.subr.mxu0 0.0
    %1586 = vmatpush1.msra.mxu0 0.0
    %1587 = vmatprep.subr.mxu0 0.0
    %1588 = vmatpush1.msra.mxu0 0.0
    %1589 = vmatprep.subr.mxu0 0.0
    %1590 = vmatpush1.msra.mxu0 0.0
    %1591 = vmatprep.subr.mxu0 0.0
    %1592 = vmatpush1.msra.mxu0 0.0
    %1593 = vmatprep.subr.mxu0 0.0
    %1594 = vmatpush1.msra.mxu0 0.0
    %1595 = vmatprep.subr.mxu0 0.0
    %1596 = vmatpush1.msra.mxu0 0.0
    %1597 = vmatprep.subr.mxu0 0.0
    %1598 = vmatpush1.msra.mxu0 0.0
    %1599 = vmatprep.subr.mxu0 0.0
    %1600 = vmatpush1.msra.mxu0 0.0
    %1601 = vmatprep.subr.mxu0 0.0
    %1602 = vmatpush1.msra.mxu0 0.0
    %1603 = vmatprep.subr.mxu0 0.0
    %1604 = vmatpush1.msra.mxu0 0.0
    %1605 = vmatprep.subr.mxu0 0.0
    %1606 = vmatpush1.msra.mxu0 0.0
    %1607 = vmatprep.mubr.f32.mxu0 0.0
    %1608 = vmatmul.mubr.f32.gmra.mrb[0].mxu0 %v1538
    %v1609 = vpop.f32.mrb[0].mxu0
    %v1610 = vadd.f32 %v1535, %v1609
    %v1611 = vpop.f32.mrb[0].mxu0
    %1612 = vmatprep.mubr.f32.mxu0 0.0
    %1613 = vmatmul.mubr.f32.gmra.mrb[0].mxu0 %v1541
    %v1614 = vpop.f32.mrb[0].mxu0
    %v1615 = vadd.f32 %v1535, %v1614
    %v1616 = vpop.f32.mrb[0].mxu0
    %1617 = vdwg.mxu0
    %1618 = vst.msk [vmem:[#allocation9] sm:$0xff] %vm65, %v1610
    %1619 = vst.msk [vmem:[#allocation9 + $0x8] sm:$0xff] %vm65, %v1615
    // Predicated region
    $region30: #{tpu_custom_call.1} parent=1 // pred_check
      _
    $region31: #{tpu_custom_call.1} parent=1 // pred_check_branch
      %1621 = sbr.rel (0) target = $region33
    $region32: #{tpu_custom_call.1} parent=1 // pred_region
      %s1623 = ssub.s32 256, 256
      %1624 = vsyncadd [#allocation5], %s1623
      %s1625 = sshll.u32 [#allocation9], 4
      %s1626 = int_to_ptr.vmem [resolvable:$true] %s1625
      %1631 = dma.vmem_to_hbm [thread:$0]  %s1626, 256, %s4, [#allocation5], 128, 128, 8
    $region33: #{tpu_custom_call.1} parent=1 // pred_fallthru
      _
    // Predicated region
    $region34: #{tpu_custom_call.1} parent=1 // pred_check
      _
    $region35: #{tpu_custom_call.1} parent=1 // pred_check_branch
      %1633 = sbr.rel (0) target = $region37
    $region36: #{tpu_custom_call.1} parent=1 // pred_region
      %1634 = dma.done [#allocation5], 256
    $region37: #{tpu_custom_call.1} parent=1 // pred_fallthru
      _
    %1635 = vsyncpa [#allocation4], 1
    %1636 = vsyncpa [#allocation7], 1
    %1637 = vsyncpa [#allocation5], 1

</llo_original>
